<compile_context>
chip_gen: v7x
topology: tpu7x:2x2x1
jax: 0.10.0
libtpu: 0.0.40
codegen_flags: <defaults>
</compile_context>

<pallas_src>
import math

import jax
import jax.numpy as jnp
from jax.experimental import pallas as pl
from jax.experimental.pallas import tpu as pltpu  # noqa: F401  (kept for TPU-specific knobs)
from jax.scipy.special import erf as _erf_exact

# ----- synthetic config (hidden must be divisible by heads) -----
B, S, H = 2, 8, 32          # batch, seq_len, hidden_size
NH = 4                      # num_attention_heads
HD = H // NH                # attention_head_size
FF = 64                     # intermediate_size
LN_EPS = 1e-12              # layer_norm_eps
INV_SQRT_HD = 1.0 / math.sqrt(HD)


def _layernorm(x, g, b):
    mu = jnp.mean(x, axis=-1, keepdims=True)
    var = jnp.mean((x - mu) ** 2, axis=-1, keepdims=True)
    return (x - mu) * jax.lax.rsqrt(var + LN_EPS) * g + b


def bert_layer_kernel(x_ref,
                      wq_ref, bq_ref, wk_ref, bk_ref, wv_ref, bv_ref,
                      wo_ref, bo_ref, ln1g_ref, ln1b_ref,
                      wi_ref, bi_ref, wo2_ref, bo2_ref, ln2g_ref, ln2b_ref,
                      y_ref, k_out_ref, v_out_ref):
    x = x_ref[...].astype(jnp.float32)                 # (B, S, H)
    x2 = x.reshape(B * S, H)                           # lane-dense rows
    xb = x2.astype(jnp.bfloat16)

    # ---- BertSelfAttention: Q, K, V projections (single big matmuls, bf16 -> f32 acc) ----
    q = jnp.dot(xb, wq_ref[...], preferred_element_type=jnp.float32) + bq_ref[...]
    k = jnp.dot(xb, wk_ref[...], preferred_element_type=jnp.float32) + bk_ref[...]
    v = jnp.dot(xb, wv_ref[...], preferred_element_type=jnp.float32) + bv_ref[...]

    # present_key_value written lane-dense as [B, S, H]; head split happens in the wrapper.
    k_out_ref[...] = k.reshape(B, S, H).astype(k_out_ref.dtype)
    v_out_ref[...] = v.reshape(B, S, H).astype(v_out_ref.dtype)

    # pre-scale q once (cheaper than scaling every score)
    q3 = (q * INV_SQRT_HD).reshape(B, S, H)            # f32
    k3 = k.reshape(B, S, H)
    v3 = v.reshape(B, S, H)

    # ---- per-head attention, batched over B; contexts concatenated for one Wo matmul ----
    ctx_heads = []
    for h in range(NH):
        lo, hi = h * HD, (h + 1) * HD
        qh = q3[:, :, lo:hi].astype(jnp.bfloat16)      # (B, S, HD)
        kh = k3[:, :, lo:hi].astype(jnp.bfloat16)
        vh = v3[:, :, lo:hi].astype(jnp.bfloat16)

        scores = jnp.einsum('bqd,bkd->bqk', qh, kh,
                            preferred_element_type=jnp.float32)          # (B, S, S)
        m = jnp.max(scores, axis=-1, keepdims=True)
        e = jnp.exp(scores - m)
        denom = jnp.sum(e, axis=-1, keepdims=True)
        probs = (e * pl.reciprocal(denom, approx=True)).astype(jnp.bfloat16)
        ctx_heads.append(jnp.einsum('bqk,bkd->bqd', probs, vh,
                                    preferred_element_type=jnp.float32))  # (B, S, HD)

    ctx = jnp.concatenate(ctx_heads, axis=-1).reshape(B * S, H)           # (B*S, H) f32

    # ---- BertSelfOutput: dense + residual + LayerNorm ----
    attn_proj = jnp.dot(ctx.astype(jnp.bfloat16), wo_ref[...],
                        preferred_element_type=jnp.float32) + bo_ref[...]
    attn_out = _layernorm(attn_proj + x2, ln1g_ref[...], ln1b_ref[...])

    # ---- BertIntermediate: dense + GELU (tanh form -> EUP) ----
    pre_act = jnp.dot(attn_out.astype(jnp.bfloat16), wi_ref[...],
                      preferred_element_type=jnp.float32) + bi_ref[...]
    inter = jax.nn.gelu(pre_act, approximate=True)

    # ---- BertOutput: dense + residual + LayerNorm ----
    ff = jnp.dot(inter.astype(jnp.bfloat16), wo2_ref[...],
                 preferred_element_type=jnp.float32) + bo2_ref[...]
    layer_out = _layernorm(ff + attn_out, ln2g_ref[...], ln2b_ref[...])

    y_ref[...] = layer_out.reshape(B, S, H).astype(y_ref.dtype)


def bert_layer_forward(x, params):
    (wq, bq, wk, bk, wv, bv, wo, bo, g1, b1, wi, bi, wo2, bo2, g2, b2) = params

    # Weights go to the MXU in bf16 (also halves their HBM->VMEM DMA bytes).
    bf = jnp.bfloat16
    out_shape = (
        jax.ShapeDtypeStruct((B, S, H), jnp.float32),   # layer_output
        jax.ShapeDtypeStruct((B, S, H), jnp.float32),   # present key (lane-dense)
        jax.ShapeDtypeStruct((B, S, H), jnp.float32),   # present value (lane-dense)
    )
    # No grid: one invocation, whole arrays resident in VMEM (fits trivially).
    y, k_flat, v_flat = pl.pallas_call(
        bert_layer_kernel,
        out_shape=out_shape,
    )(x,
      wq.astype(bf), bq, wk.astype(bf), bk, wv.astype(bf), bv,
      wo.astype(bf), bo, g1, b1,
      wi.astype(bf), bi, wo2.astype(bf), bo2, g2, b2)

    # transpose_for_scores layout [B, NH, S, HD] done outside the kernel (cheap, lane-dense writes inside).
    pres_k = k_flat.reshape(B, S, NH, HD).transpose(0, 2, 1, 3)
    pres_v = v_flat.reshape(B, S, NH, HD).transpose(0, 2, 1, 3)
    return y, pres_k, pres_v


def reference_forward(x, params):
    """Pure-JAX f32 reference mirroring the torch module (exact-erf GELU, exact divide)."""
    (wq, bq, wk, bk, wv, bv, wo, bo, g1, b1, wi, bi, wo2, bo2, g2, b2) = params
    q = x @ wq + bq
    k = x @ wk + bk
    v = x @ wv + bv

    def split(t):  # (B, S, H) -> (B, NH, S, HD)
        return t.reshape(B, S, NH, HD).transpose(0, 2, 1, 3)

    qh, kh, vh = split(q), split(k), split(v)
    scores = jnp.einsum('bhqd,bhkd->bhqk', qh, kh) * INV_SQRT_HD
    probs = jax.nn.softmax(scores, axis=-1)
    ctx = jnp.einsum('bhqk,bhkd->bhqd', probs, vh)
    ctx = ctx.transpose(0, 2, 1, 3).reshape(B, S, H)

    attn = _layernorm(ctx @ wo + bo + x, g1, b1)
    pre = attn @ wi + bi
    inter = 0.5 * pre * (1.0 + _erf_exact(pre / math.sqrt(2.0)))   # exact GELU
    out = _layernorm(inter @ wo2 + bo2 + attn, g2, b2)
    return out, kh, vh


def init_params(key):
    ks = jax.random.split(key, 8)
    std = 0.02
    wq = jax.random.normal(ks[0], (H, H), jnp.float32) * std
    wk = jax.random.normal(ks[1], (H, H), jnp.float32) * std
    wv = jax.random.normal(ks[2], (H, H), jnp.float32) * std
    wo = jax.random.normal(ks[3], (H, H), jnp.float32) * std
    wi = jax.random.normal(ks[4], (H, FF), jnp.float32) * std
    wo2 = jax.random.normal(ks[5], (FF, H), jnp.float32) * std
    bq = jax.random.normal(ks[6], (1, H), jnp.float32) * std
    bk = jnp.zeros((1, H), jnp.float32)
    bv = jax.random.normal(ks[7], (1, H), jnp.float32) * std
    bo = jnp.zeros((1, H), jnp.float32)
    bi = jnp.zeros((1, FF), jnp.float32)
    bo2 = jnp.zeros((1, H), jnp.float32)
    g1 = jnp.ones((1, H), jnp.float32)
    b1 = jnp.zeros((1, H), jnp.float32)
    g2 = jnp.ones((1, H), jnp.float32)
    b2 = jnp.zeros((1, H), jnp.float32)
    return (wq, bq, wk, bk, wv, bv, wo, bo, g1, b1, wi, bi, wo2, bo2, g2, b2)


if __name__ == "__main__":
    key = jax.random.PRNGKey(0)
    k_x, k_p = jax.random.split(key)
    x = jax.random.normal(k_x, (B, S, H), jnp.float32)
    params = init_params(k_p)

    layer_out, pres_k, pres_v = bert_layer_forward(x, params)
    jax.block_until_ready((layer_out, pres_k, pres_v))

    ref_out, ref_k, ref_v = reference_forward(x, params)
    assert layer_out.shape == (B, S, H)
    assert pres_k.shape == (B, NH, S, HD) and pres_v.shape == (B, NH, S, HD)
    # kernel runs bf16 matmuls / approx reciprocal / tanh-GELU vs. exact f32 reference
    assert jnp.allclose(layer_out, ref_out, atol=3e-2, rtol=3e-2)
    assert jnp.allclose(pres_k, ref_k, atol=1e-2, rtol=1e-2)
    assert jnp.allclose(pres_v, ref_v, atol=1e-2, rtol=1e-2)

    print("KERNEL_OK")
</pallas_src>

<mosaic_0001>
module attributes {stable_mosaic.version = 11 : i64} {
  func.func @bert_layer_kernel(%arg0: memref<2x8x32xf32, #tpu.memory_space<vmem>>, %arg1: memref<32x32xbf16, #tpu.memory_space<vmem>>, %arg2: memref<1x32xf32, #tpu.memory_space<vmem>>, %arg3: memref<32x32xbf16, #tpu.memory_space<vmem>>, %arg4: memref<1x32xf32, #tpu.memory_space<vmem>>, %arg5: memref<32x32xbf16, #tpu.memory_space<vmem>>, %arg6: memref<1x32xf32, #tpu.memory_space<vmem>>, %arg7: memref<32x32xbf16, #tpu.memory_space<vmem>>, %arg8: memref<1x32xf32, #tpu.memory_space<vmem>>, %arg9: memref<1x32xf32, #tpu.memory_space<vmem>>, %arg10: memref<1x32xf32, #tpu.memory_space<vmem>>, %arg11: memref<32x64xbf16, #tpu.memory_space<vmem>>, %arg12: memref<1x64xf32, #tpu.memory_space<vmem>>, %arg13: memref<64x32xbf16, #tpu.memory_space<vmem>>, %arg14: memref<1x32xf32, #tpu.memory_space<vmem>>, %arg15: memref<1x32xf32, #tpu.memory_space<vmem>>, %arg16: memref<1x32xf32, #tpu.memory_space<vmem>>, %arg17: memref<2x8x32xf32, #tpu.memory_space<vmem>>, %arg18: memref<2x8x32xf32, #tpu.memory_space<vmem>>, %arg19: memref<2x8x32xf32, #tpu.memory_space<vmem>>) attributes {dimension_semantics = [], scalar_prefetch = 0 : i64, scratch_operands = 0 : i64, tpu.core_type = #tpu.core_type<tc>} {
    %c0 = arith.constant 0 : index
    %c0_0 = arith.constant 0 : index
    %c0_1 = arith.constant 0 : index
    %0 = vector.load %arg0[%c0, %c0_0, %c0_1] : memref<2x8x32xf32, #tpu.memory_space<vmem>>, vector<2x8x32xf32>
    %1 = vector.shape_cast %0 : vector<2x8x32xf32> to vector<16x32xf32>
    %2 = arith.truncf %1 : vector<16x32xf32> to vector<16x32xbf16>
    %c0_2 = arith.constant 0 : index
    %c0_3 = arith.constant 0 : index
    %3 = vector.load %arg1[%c0_2, %c0_3] : memref<32x32xbf16, #tpu.memory_space<vmem>>, vector<32x32xbf16>
    %cst = arith.constant dense<0.000000e+00> : vector<16x32xf32>
    %4 = tpu.matmul %2, %3, %cst {dimension_numbers = #tpu.dot_dimension_numbers<[1], [0], [0], [1], [0, 0, 1, 1], [], []>} : vector<16x32xbf16>, vector<32x32xbf16>, vector<16x32xf32> -> vector<16x32xf32>
    %c0_4 = arith.constant 0 : index
    %c0_5 = arith.constant 0 : index
    %5 = vector.load %arg2[%c0_4, %c0_5] : memref<1x32xf32, #tpu.memory_space<vmem>>, vector<1x32xf32>
    %6 = vector.broadcast %5 : vector<1x32xf32> to vector<16x32xf32>
    %7 = arith.addf %4, %6 : vector<16x32xf32>
    %c0_6 = arith.constant 0 : index
    %c0_7 = arith.constant 0 : index
    %8 = vector.load %arg3[%c0_6, %c0_7] : memref<32x32xbf16, #tpu.memory_space<vmem>>, vector<32x32xbf16>
    %cst_8 = arith.constant dense<0.000000e+00> : vector<16x32xf32>
    %9 = tpu.matmul %2, %8, %cst_8 {dimension_numbers = #tpu.dot_dimension_numbers<[1], [0], [0], [1], [0, 0, 1, 1], [], []>} : vector<16x32xbf16>, vector<32x32xbf16>, vector<16x32xf32> -> vector<16x32xf32>
    %c0_9 = arith.constant 0 : index
    %c0_10 = arith.constant 0 : index
    %10 = vector.load %arg4[%c0_9, %c0_10] : memref<1x32xf32, #tpu.memory_space<vmem>>, vector<1x32xf32>
    %11 = vector.broadcast %10 : vector<1x32xf32> to vector<16x32xf32>
    %12 = arith.addf %9, %11 : vector<16x32xf32>
    %c0_11 = arith.constant 0 : index
    %c0_12 = arith.constant 0 : index
    %13 = vector.load %arg5[%c0_11, %c0_12] : memref<32x32xbf16, #tpu.memory_space<vmem>>, vector<32x32xbf16>
    %cst_13 = arith.constant dense<0.000000e+00> : vector<16x32xf32>
    %14 = tpu.matmul %2, %13, %cst_13 {dimension_numbers = #tpu.dot_dimension_numbers<[1], [0], [0], [1], [0, 0, 1, 1], [], []>} : vector<16x32xbf16>, vector<32x32xbf16>, vector<16x32xf32> -> vector<16x32xf32>
    %c0_14 = arith.constant 0 : index
    %c0_15 = arith.constant 0 : index
    %15 = vector.load %arg6[%c0_14, %c0_15] : memref<1x32xf32, #tpu.memory_space<vmem>>, vector<1x32xf32>
    %16 = vector.broadcast %15 : vector<1x32xf32> to vector<16x32xf32>
    %17 = arith.addf %14, %16 : vector<16x32xf32>
    %18 = vector.shape_cast %12 : vector<16x32xf32> to vector<2x8x32xf32>
    %c0_16 = arith.constant 0 : index
    %c0_17 = arith.constant 0 : index
    %c0_18 = arith.constant 0 : index
    %19 = vector.load %arg18[%c0_16, %c0_17, %c0_18] : memref<2x8x32xf32, #tpu.memory_space<vmem>>, vector<2x8x32xf32>
    tpu.vector_store %arg18[%c0_16, %c0_17, %c0_18], %18 {strides = array<i32>} : memref<2x8x32xf32, #tpu.memory_space<vmem>>, vector<2x8x32xf32>,
    %20 = vector.shape_cast %17 : vector<16x32xf32> to vector<2x8x32xf32>
    %c0_19 = arith.constant 0 : index
    %c0_20 = arith.constant 0 : index
    %c0_21 = arith.constant 0 : index
    %21 = vector.load %arg19[%c0_19, %c0_20, %c0_21] : memref<2x8x32xf32, #tpu.memory_space<vmem>>, vector<2x8x32xf32>
    tpu.vector_store %arg19[%c0_19, %c0_20, %c0_21], %20 {strides = array<i32>} : memref<2x8x32xf32, #tpu.memory_space<vmem>>, vector<2x8x32xf32>,
    %cst_22 = arith.constant 0.353553385 : f32
    %22 = vector.broadcast %cst_22 : f32 to vector<16x32xf32>
    %23 = arith.mulf %7, %22 : vector<16x32xf32>
    %24 = vector.shape_cast %23 : vector<16x32xf32> to vector<2x8x32xf32>
    %25 = vector.shape_cast %12 : vector<16x32xf32> to vector<2x8x32xf32>
    %26 = vector.shape_cast %17 : vector<16x32xf32> to vector<2x8x32xf32>
    %27 = vector.extract_strided_slice %24 {offsets = [0, 0, 0], sizes = [2, 8, 8], strides = [1, 1, 1]} : vector<2x8x32xf32> to vector<2x8x8xf32>
    %28 = arith.truncf %27 : vector<2x8x8xf32> to vector<2x8x8xbf16>
    %29 = vector.extract_strided_slice %25 {offsets = [0, 0, 0], sizes = [2, 8, 8], strides = [1, 1, 1]} : vector<2x8x32xf32> to vector<2x8x8xf32>
    %30 = arith.truncf %29 : vector<2x8x8xf32> to vector<2x8x8xbf16>
    %31 = vector.extract_strided_slice %26 {offsets = [0, 0, 0], sizes = [2, 8, 8], strides = [1, 1, 1]} : vector<2x8x32xf32> to vector<2x8x8xf32>
    %32 = arith.truncf %31 : vector<2x8x8xf32> to vector<2x8x8xbf16>
    "tpu.trace_start"() <{level = 10 : i32, message = "bqd,bkd->bqk"}> : () -> ()
    %cst_23 = arith.constant dense<0.000000e+00> : vector<2x8x8xf32>
    %33 = tpu.matmul %28, %30, %cst_23 {dimension_numbers = #tpu.dot_dimension_numbers<[2], [2], [1], [1], [0, 0, 0, 1, 1, 1], [0], [0]>} : vector<2x8x8xbf16>, vector<2x8x8xbf16>, vector<2x8x8xf32> -> vector<2x8x8xf32>
    "tpu.trace_stop"() : () -> ()
    %cst_24 = arith.constant dense<0xFF800000> : vector<2x8xf32>
    %34 = vector.multi_reduction <maximumf>, %33, %cst_24 [2] : vector<2x8x8xf32> to vector<2x8xf32>
    %35 = vector.shape_cast %34 : vector<2x8xf32> to vector<2x8x1xf32>
    %36 = vector.broadcast %35 : vector<2x8x1xf32> to vector<2x8x8xf32>
    %37 = arith.subf %33, %36 : vector<2x8x8xf32>
    %38 = math.exp %37 : vector<2x8x8xf32>
    %cst_25 = arith.constant dense<0.000000e+00> : vector<2x8xf32>
    %39 = vector.multi_reduction <add>, %38, %cst_25 [2] : vector<2x8x8xf32> to vector<2x8xf32>
    %40 = vector.shape_cast %39 : vector<2x8xf32> to vector<2x8x1xf32>
    %41 = tpu.reciprocal %40 {approx = true} : vector<2x8x1xf32> -> vector<2x8x1xf32>
    %42 = vector.broadcast %41 : vector<2x8x1xf32> to vector<2x8x8xf32>
    %43 = arith.mulf %38, %42 : vector<2x8x8xf32>
    %44 = arith.truncf %43 : vector<2x8x8xf32> to vector<2x8x8xbf16>
    "tpu.trace_start"() <{level = 10 : i32, message = "bqk,bkd->bqd"}> : () -> ()
    %cst_26 = arith.constant dense<0.000000e+00> : vector<2x8x8xf32>
    %45 = tpu.matmul %44, %32, %cst_26 {dimension_numbers = #tpu.dot_dimension_numbers<[2], [1], [1], [2], [0, 0, 0, 1, 1, 2], [0], [0]>} : vector<2x8x8xbf16>, vector<2x8x8xbf16>, vector<2x8x8xf32> -> vector<2x8x8xf32>
    "tpu.trace_stop"() : () -> ()
    %46 = vector.extract_strided_slice %24 {offsets = [0, 0, 8], sizes = [2, 8, 8], strides = [1, 1, 1]} : vector<2x8x32xf32> to vector<2x8x8xf32>
    %47 = arith.truncf %46 : vector<2x8x8xf32> to vector<2x8x8xbf16>
    %48 = vector.extract_strided_slice %25 {offsets = [0, 0, 8], sizes = [2, 8, 8], strides = [1, 1, 1]} : vector<2x8x32xf32> to vector<2x8x8xf32>
    %49 = arith.truncf %48 : vector<2x8x8xf32> to vector<2x8x8xbf16>
    %50 = vector.extract_strided_slice %26 {offsets = [0, 0, 8], sizes = [2, 8, 8], strides = [1, 1, 1]} : vector<2x8x32xf32> to vector<2x8x8xf32>
    %51 = arith.truncf %50 : vector<2x8x8xf32> to vector<2x8x8xbf16>
    "tpu.trace_start"() <{level = 10 : i32, message = "bqd,bkd->bqk"}> : () -> ()
    %cst_27 = arith.constant dense<0.000000e+00> : vector<2x8x8xf32>
    %52 = tpu.matmul %47, %49, %cst_27 {dimension_numbers = #tpu.dot_dimension_numbers<[2], [2], [1], [1], [0, 0, 0, 1, 1, 1], [0], [0]>} : vector<2x8x8xbf16>, vector<2x8x8xbf16>, vector<2x8x8xf32> -> vector<2x8x8xf32>
    "tpu.trace_stop"() : () -> ()
    %cst_28 = arith.constant dense<0xFF800000> : vector<2x8xf32>
    %53 = vector.multi_reduction <maximumf>, %52, %cst_28 [2] : vector<2x8x8xf32> to vector<2x8xf32>
    %54 = vector.shape_cast %53 : vector<2x8xf32> to vector<2x8x1xf32>
    %55 = vector.broadcast %54 : vector<2x8x1xf32> to vector<2x8x8xf32>
    %56 = arith.subf %52, %55 : vector<2x8x8xf32>
    %57 = math.exp %56 : vector<2x8x8xf32>
    %cst_29 = arith.constant dense<0.000000e+00> : vector<2x8xf32>
    %58 = vector.multi_reduction <add>, %57, %cst_29 [2] : vector<2x8x8xf32> to vector<2x8xf32>
    %59 = vector.shape_cast %58 : vector<2x8xf32> to vector<2x8x1xf32>
    %60 = tpu.reciprocal %59 {approx = true} : vector<2x8x1xf32> -> vector<2x8x1xf32>
    %61 = vector.broadcast %60 : vector<2x8x1xf32> to vector<2x8x8xf32>
    %62 = arith.mulf %57, %61 : vector<2x8x8xf32>
    %63 = arith.truncf %62 : vector<2x8x8xf32> to vector<2x8x8xbf16>
    "tpu.trace_start"() <{level = 10 : i32, message = "bqk,bkd->bqd"}> : () -> ()
    %cst_30 = arith.constant dense<0.000000e+00> : vector<2x8x8xf32>
    %64 = tpu.matmul %63, %51, %cst_30 {dimension_numbers = #tpu.dot_dimension_numbers<[2], [1], [1], [2], [0, 0, 0, 1, 1, 2], [0], [0]>} : vector<2x8x8xbf16>, vector<2x8x8xbf16>, vector<2x8x8xf32> -> vector<2x8x8xf32>
    "tpu.trace_stop"() : () -> ()
    %65 = vector.extract_strided_slice %24 {offsets = [0, 0, 16], sizes = [2, 8, 8], strides = [1, 1, 1]} : vector<2x8x32xf32> to vector<2x8x8xf32>
    %66 = arith.truncf %65 : vector<2x8x8xf32> to vector<2x8x8xbf16>
    %67 = vector.extract_strided_slice %25 {offsets = [0, 0, 16], sizes = [2, 8, 8], strides = [1, 1, 1]} : vector<2x8x32xf32> to vector<2x8x8xf32>
    %68 = arith.truncf %67 : vector<2x8x8xf32> to vector<2x8x8xbf16>
    %69 = vector.extract_strided_slice %26 {offsets = [0, 0, 16], sizes = [2, 8, 8], strides = [1, 1, 1]} : vector<2x8x32xf32> to vector<2x8x8xf32>
    %70 = arith.truncf %69 : vector<2x8x8xf32> to vector<2x8x8xbf16>
    "tpu.trace_start"() <{level = 10 : i32, message = "bqd,bkd->bqk"}> : () -> ()
    %cst_31 = arith.constant dense<0.000000e+00> : vector<2x8x8xf32>
    %71 = tpu.matmul %66, %68, %cst_31 {dimension_numbers = #tpu.dot_dimension_numbers<[2], [2], [1], [1], [0, 0, 0, 1, 1, 1], [0], [0]>} : vector<2x8x8xbf16>, vector<2x8x8xbf16>, vector<2x8x8xf32> -> vector<2x8x8xf32>
    "tpu.trace_stop"() : () -> ()
    %cst_32 = arith.constant dense<0xFF800000> : vector<2x8xf32>
    %72 = vector.multi_reduction <maximumf>, %71, %cst_32 [2] : vector<2x8x8xf32> to vector<2x8xf32>
    %73 = vector.shape_cast %72 : vector<2x8xf32> to vector<2x8x1xf32>
    %74 = vector.broadcast %73 : vector<2x8x1xf32> to vector<2x8x8xf32>
    %75 = arith.subf %71, %74 : vector<2x8x8xf32>
    %76 = math.exp %75 : vector<2x8x8xf32>
    %cst_33 = arith.constant dense<0.000000e+00> : vector<2x8xf32>
    %77 = vector.multi_reduction <add>, %76, %cst_33 [2] : vector<2x8x8xf32> to vector<2x8xf32>
    %78 = vector.shape_cast %77 : vector<2x8xf32> to vector<2x8x1xf32>
    %79 = tpu.reciprocal %78 {approx = true} : vector<2x8x1xf32> -> vector<2x8x1xf32>
    %80 = vector.broadcast %79 : vector<2x8x1xf32> to vector<2x8x8xf32>
    %81 = arith.mulf %76, %80 : vector<2x8x8xf32>
    %82 = arith.truncf %81 : vector<2x8x8xf32> to vector<2x8x8xbf16>
    "tpu.trace_start"() <{level = 10 : i32, message = "bqk,bkd->bqd"}> : () -> ()
    %cst_34 = arith.constant dense<0.000000e+00> : vector<2x8x8xf32>
    %83 = tpu.matmul %82, %70, %cst_34 {dimension_numbers = #tpu.dot_dimension_numbers<[2], [1], [1], [2], [0, 0, 0, 1, 1, 2], [0], [0]>} : vector<2x8x8xbf16>, vector<2x8x8xbf16>, vector<2x8x8xf32> -> vector<2x8x8xf32>
    "tpu.trace_stop"() : () -> ()
    %84 = vector.extract_strided_slice %24 {offsets = [0, 0, 24], sizes = [2, 8, 8], strides = [1, 1, 1]} : vector<2x8x32xf32> to vector<2x8x8xf32>
    %85 = arith.truncf %84 : vector<2x8x8xf32> to vector<2x8x8xbf16>
    %86 = vector.extract_strided_slice %25 {offsets = [0, 0, 24], sizes = [2, 8, 8], strides = [1, 1, 1]} : vector<2x8x32xf32> to vector<2x8x8xf32>
    %87 = arith.truncf %86 : vector<2x8x8xf32> to vector<2x8x8xbf16>
    %88 = vector.extract_strided_slice %26 {offsets = [0, 0, 24], sizes = [2, 8, 8], strides = [1, 1, 1]} : vector<2x8x32xf32> to vector<2x8x8xf32>
    %89 = arith.truncf %88 : vector<2x8x8xf32> to vector<2x8x8xbf16>
    "tpu.trace_start"() <{level = 10 : i32, message = "bqd,bkd->bqk"}> : () -> ()
    %cst_35 = arith.constant dense<0.000000e+00> : vector<2x8x8xf32>
    %90 = tpu.matmul %85, %87, %cst_35 {dimension_numbers = #tpu.dot_dimension_numbers<[2], [2], [1], [1], [0, 0, 0, 1, 1, 1], [0], [0]>} : vector<2x8x8xbf16>, vector<2x8x8xbf16>, vector<2x8x8xf32> -> vector<2x8x8xf32>
    "tpu.trace_stop"() : () -> ()
    %cst_36 = arith.constant dense<0xFF800000> : vector<2x8xf32>
    %91 = vector.multi_reduction <maximumf>, %90, %cst_36 [2] : vector<2x8x8xf32> to vector<2x8xf32>
    %92 = vector.shape_cast %91 : vector<2x8xf32> to vector<2x8x1xf32>
    %93 = vector.broadcast %92 : vector<2x8x1xf32> to vector<2x8x8xf32>
    %94 = arith.subf %90, %93 : vector<2x8x8xf32>
    %95 = math.exp %94 : vector<2x8x8xf32>
    %cst_37 = arith.constant dense<0.000000e+00> : vector<2x8xf32>
    %96 = vector.multi_reduction <add>, %95, %cst_37 [2] : vector<2x8x8xf32> to vector<2x8xf32>
    %97 = vector.shape_cast %96 : vector<2x8xf32> to vector<2x8x1xf32>
    %98 = tpu.reciprocal %97 {approx = true} : vector<2x8x1xf32> -> vector<2x8x1xf32>
    %99 = vector.broadcast %98 : vector<2x8x1xf32> to vector<2x8x8xf32>
    %100 = arith.mulf %95, %99 : vector<2x8x8xf32>
    %101 = arith.truncf %100 : vector<2x8x8xf32> to vector<2x8x8xbf16>
    "tpu.trace_start"() <{level = 10 : i32, message = "bqk,bkd->bqd"}> : () -> ()
    %cst_38 = arith.constant dense<0.000000e+00> : vector<2x8x8xf32>
    %102 = tpu.matmul %101, %89, %cst_38 {dimension_numbers = #tpu.dot_dimension_numbers<[2], [1], [1], [2], [0, 0, 0, 1, 1, 2], [0], [0]>} : vector<2x8x8xbf16>, vector<2x8x8xbf16>, vector<2x8x8xf32> -> vector<2x8x8xf32>
    "tpu.trace_stop"() : () -> ()
    %103 = tpu.concatenate %45, %64, %83, %102 in 2 : vector<2x8x8xf32>, vector<2x8x8xf32>, vector<2x8x8xf32>, vector<2x8x8xf32> -> vector<2x8x32xf32>
    %104 = vector.shape_cast %103 : vector<2x8x32xf32> to vector<16x32xf32>
    %105 = arith.truncf %104 : vector<16x32xf32> to vector<16x32xbf16>
    %c0_39 = arith.constant 0 : index
    %c0_40 = arith.constant 0 : index
    %106 = vector.load %arg7[%c0_39, %c0_40] : memref<32x32xbf16, #tpu.memory_space<vmem>>, vector<32x32xbf16>
    %cst_41 = arith.constant dense<0.000000e+00> : vector<16x32xf32>
    %107 = tpu.matmul %105, %106, %cst_41 {dimension_numbers = #tpu.dot_dimension_numbers<[1], [0], [0], [1], [0, 0, 1, 1], [], []>} : vector<16x32xbf16>, vector<32x32xbf16>, vector<16x32xf32> -> vector<16x32xf32>
    %c0_42 = arith.constant 0 : index
    %c0_43 = arith.constant 0 : index
    %108 = vector.load %arg8[%c0_42, %c0_43] : memref<1x32xf32, #tpu.memory_space<vmem>>, vector<1x32xf32>
    %109 = vector.broadcast %108 : vector<1x32xf32> to vector<16x32xf32>
    %110 = arith.addf %107, %109 : vector<16x32xf32>
    %111 = arith.addf %110, %1 : vector<16x32xf32>
    %c0_44 = arith.constant 0 : index
    %c0_45 = arith.constant 0 : index
    %112 = vector.load %arg9[%c0_44, %c0_45] : memref<1x32xf32, #tpu.memory_space<vmem>>, vector<1x32xf32>
    %c0_46 = arith.constant 0 : index
    %c0_47 = arith.constant 0 : index
    %113 = vector.load %arg10[%c0_46, %c0_47] : memref<1x32xf32, #tpu.memory_space<vmem>>, vector<1x32xf32>
    %cst_48 = arith.constant dense<0.000000e+00> : vector<16xf32>
    %114 = vector.multi_reduction <add>, %111, %cst_48 [1] : vector<16x32xf32> to vector<16xf32>
    %115 = vector.shape_cast %114 : vector<16xf32> to vector<16x1xf32>
    %cst_49 = arith.constant 3.200000e+01 : f32
    %116 = vector.broadcast %cst_49 : f32 to vector<16x1xf32>
    %117 = arith.divf %115, %116 : vector<16x1xf32>
    %118 = vector.broadcast %117 : vector<16x1xf32> to vector<16x32xf32>
    %119 = arith.subf %111, %118 : vector<16x32xf32>
    %120 = arith.mulf %119, %119 : vector<16x32xf32>
    %cst_50 = arith.constant dense<0.000000e+00> : vector<16xf32>
    %121 = vector.multi_reduction <add>, %120, %cst_50 [1] : vector<16x32xf32> to vector<16xf32>
    %122 = vector.shape_cast %121 : vector<16xf32> to vector<16x1xf32>
    %cst_51 = arith.constant 3.200000e+01 : f32
    %123 = vector.broadcast %cst_51 : f32 to vector<16x1xf32>
    %124 = arith.divf %122, %123 : vector<16x1xf32>
    %125 = vector.broadcast %117 : vector<16x1xf32> to vector<16x32xf32>
    %126 = arith.subf %111, %125 : vector<16x32xf32>
    %cst_52 = arith.constant 9.99999996E-13 : f32
    %127 = vector.broadcast %cst_52 : f32 to vector<16x1xf32>
    %128 = arith.addf %124, %127 : vector<16x1xf32>
    %129 = math.rsqrt %128 : vector<16x1xf32>
    %130 = vector.broadcast %129 : vector<16x1xf32> to vector<16x32xf32>
    %131 = arith.mulf %126, %130 : vector<16x32xf32>
    %132 = vector.broadcast %112 : vector<1x32xf32> to vector<16x32xf32>
    %133 = arith.mulf %131, %132 : vector<16x32xf32>
    %134 = vector.broadcast %113 : vector<1x32xf32> to vector<16x32xf32>
    %135 = arith.addf %133, %134 : vector<16x32xf32>
    %136 = arith.truncf %135 : vector<16x32xf32> to vector<16x32xbf16>
    %c0_53 = arith.constant 0 : index
    %c0_54 = arith.constant 0 : index
    %137 = vector.load %arg11[%c0_53, %c0_54] : memref<32x64xbf16, #tpu.memory_space<vmem>>, vector<32x64xbf16>
    %cst_55 = arith.constant dense<0.000000e+00> : vector<16x64xf32>
    %138 = tpu.matmul %136, %137, %cst_55 {dimension_numbers = #tpu.dot_dimension_numbers<[1], [0], [0], [1], [0, 0, 1, 1], [], []>} : vector<16x32xbf16>, vector<32x64xbf16>, vector<16x64xf32> -> vector<16x64xf32>
    %c0_56 = arith.constant 0 : index
    %c0_57 = arith.constant 0 : index
    %139 = vector.load %arg12[%c0_56, %c0_57] : memref<1x64xf32, #tpu.memory_space<vmem>>, vector<1x64xf32>
    %140 = vector.broadcast %139 : vector<1x64xf32> to vector<16x64xf32>
    %141 = arith.addf %138, %140 : vector<16x64xf32>
    %142 = arith.mulf %141, %141 : vector<16x64xf32>
    %143 = arith.mulf %141, %142 : vector<16x64xf32>
    %cst_58 = arith.constant 4.471500e-02 : f32
    %144 = vector.broadcast %cst_58 : f32 to vector<16x64xf32>
    %145 = arith.mulf %144, %143 : vector<16x64xf32>
    %146 = arith.addf %141, %145 : vector<16x64xf32>
    %cst_59 = arith.constant 0.797884583 : f32
    %147 = vector.broadcast %cst_59 : f32 to vector<16x64xf32>
    %148 = arith.mulf %147, %146 : vector<16x64xf32>
    %149 = math.tanh %148 : vector<16x64xf32>
    %cst_60 = arith.constant 1.000000e+00 : f32
    %150 = vector.broadcast %cst_60 : f32 to vector<16x64xf32>
    %151 = arith.addf %150, %149 : vector<16x64xf32>
    %cst_61 = arith.constant 5.000000e-01 : f32
    %152 = vector.broadcast %cst_61 : f32 to vector<16x64xf32>
    %153 = arith.mulf %152, %151 : vector<16x64xf32>
    %154 = arith.mulf %141, %153 : vector<16x64xf32>
    %155 = arith.truncf %154 : vector<16x64xf32> to vector<16x64xbf16>
    %c0_62 = arith.constant 0 : index
    %c0_63 = arith.constant 0 : index
    %156 = vector.load %arg13[%c0_62, %c0_63] : memref<64x32xbf16, #tpu.memory_space<vmem>>, vector<64x32xbf16>
    %cst_64 = arith.constant dense<0.000000e+00> : vector<16x32xf32>
    %157 = tpu.matmul %155, %156, %cst_64 {dimension_numbers = #tpu.dot_dimension_numbers<[1], [0], [0], [1], [0, 0, 1, 1], [], []>} : vector<16x64xbf16>, vector<64x32xbf16>, vector<16x32xf32> -> vector<16x32xf32>
    %c0_65 = arith.constant 0 : index
    %c0_66 = arith.constant 0 : index
    %158 = vector.load %arg14[%c0_65, %c0_66] : memref<1x32xf32, #tpu.memory_space<vmem>>, vector<1x32xf32>
    %159 = vector.broadcast %158 : vector<1x32xf32> to vector<16x32xf32>
    %160 = arith.addf %157, %159 : vector<16x32xf32>
    %161 = arith.addf %160, %135 : vector<16x32xf32>
    %c0_67 = arith.constant 0 : index
    %c0_68 = arith.constant 0 : index
    %162 = vector.load %arg15[%c0_67, %c0_68] : memref<1x32xf32, #tpu.memory_space<vmem>>, vector<1x32xf32>
    %c0_69 = arith.constant 0 : index
    %c0_70 = arith.constant 0 : index
    %163 = vector.load %arg16[%c0_69, %c0_70] : memref<1x32xf32, #tpu.memory_space<vmem>>, vector<1x32xf32>
    %cst_71 = arith.constant dense<0.000000e+00> : vector<16xf32>
    %164 = vector.multi_reduction <add>, %161, %cst_71 [1] : vector<16x32xf32> to vector<16xf32>
    %165 = vector.shape_cast %164 : vector<16xf32> to vector<16x1xf32>
    %cst_72 = arith.constant 3.200000e+01 : f32
    %166 = vector.broadcast %cst_72 : f32 to vector<16x1xf32>
    %167 = arith.divf %165, %166 : vector<16x1xf32>
    %168 = vector.broadcast %167 : vector<16x1xf32> to vector<16x32xf32>
    %169 = arith.subf %161, %168 : vector<16x32xf32>
    %170 = arith.mulf %169, %169 : vector<16x32xf32>
    %cst_73 = arith.constant dense<0.000000e+00> : vector<16xf32>
    %171 = vector.multi_reduction <add>, %170, %cst_73 [1] : vector<16x32xf32> to vector<16xf32>
    %172 = vector.shape_cast %171 : vector<16xf32> to vector<16x1xf32>
    %cst_74 = arith.constant 3.200000e+01 : f32
    %173 = vector.broadcast %cst_74 : f32 to vector<16x1xf32>
    %174 = arith.divf %172, %173 : vector<16x1xf32>
    %175 = vector.broadcast %167 : vector<16x1xf32> to vector<16x32xf32>
    %176 = arith.subf %161, %175 : vector<16x32xf32>
    %cst_75 = arith.constant 9.99999996E-13 : f32
    %177 = vector.broadcast %cst_75 : f32 to vector<16x1xf32>
    %178 = arith.addf %174, %177 : vector<16x1xf32>
    %179 = math.rsqrt %178 : vector<16x1xf32>
    %180 = vector.broadcast %179 : vector<16x1xf32> to vector<16x32xf32>
    %181 = arith.mulf %176, %180 : vector<16x32xf32>
    %182 = vector.broadcast %162 : vector<1x32xf32> to vector<16x32xf32>
    %183 = arith.mulf %181, %182 : vector<16x32xf32>
    %184 = vector.broadcast %163 : vector<1x32xf32> to vector<16x32xf32>
    %185 = arith.addf %183, %184 : vector<16x32xf32>
    %186 = vector.shape_cast %185 : vector<16x32xf32> to vector<2x8x32xf32>
    %c0_76 = arith.constant 0 : index
    %c0_77 = arith.constant 0 : index
    %c0_78 = arith.constant 0 : index
    %187 = vector.load %arg17[%c0_76, %c0_77, %c0_78] : memref<2x8x32xf32, #tpu.memory_space<vmem>>, vector<2x8x32xf32>
    tpu.vector_store %arg17[%c0_76, %c0_77, %c0_78], %186 {strides = array<i32>} : memref<2x8x32xf32, #tpu.memory_space<vmem>>, vector<2x8x32xf32>,
    return
  }
}

</mosaic_0001>

<llo_original>
// kernel: tpu_custom_call.1
$region0: #{tpu_custom_call.1}
  #allocation0 [shape = 'u32[]', space=smem, size = 0x4, offset = 0x4, fixed_abs, tag = 'smem constant byte address 0x4 - core index']
  #allocation1 [shape = 'u32[144,128]{1,0:T(1,128)}', space=vmem, size = 0x12000, scoped, tag = 'internal scratch']
  %s0 = inlined_call_operand.vmem [shape: f32[2,8,32], index: 0, kind: input, shape index: {}]
  %s1 = inlined_call_operand.vmem [shape: bf16[32,32], index: 1, kind: input, shape index: {}]
  %s2 = inlined_call_operand.vmem [shape: f32[1,32], index: 2, kind: input, shape index: {}]
  %s3 = inlined_call_operand.vmem [shape: bf16[32,32], index: 3, kind: input, shape index: {}]
  %s4 = inlined_call_operand.vmem [shape: f32[1,32], index: 4, kind: input, shape index: {}]
  %s5 = inlined_call_operand.hbm [shape: bf16[32,32], index: 5, kind: input, shape index: {}]
  %s6 = inlined_call_operand.hbm [shape: f32[1,32], index: 6, kind: input, shape index: {}]
  %s7 = inlined_call_operand.hbm [shape: bf16[32,32], index: 7, kind: input, shape index: {}]
  %s8 = inlined_call_operand.hbm [shape: f32[1,32], index: 8, kind: input, shape index: {}]
  %s9 = inlined_call_operand.hbm [shape: f32[1,32], index: 9, kind: input, shape index: {}]
  %s10 = inlined_call_operand.vmem [shape: f32[1,32], index: 10, kind: input, shape index: {}]
  %s11 = inlined_call_operand.vmem [shape: bf16[32,64], index: 11, kind: input, shape index: {}]
  %s12 = inlined_call_operand.vmem [shape: f32[1,64], index: 12, kind: input, shape index: {}]
  %s13 = inlined_call_operand.vmem [shape: bf16[64,32], index: 13, kind: input, shape index: {}]
  %s14 = inlined_call_operand.vmem [shape: f32[1,32], index: 14, kind: input, shape index: {}]
  %s15 = inlined_call_operand.vmem [shape: f32[1,32], index: 15, kind: input, shape index: {}]
  %s16 = inlined_call_operand.vmem [shape: f32[1,32], index: 16, kind: input, shape index: {}]
  %s17 = inlined_call_operand.hbm [shape: f32[2,8,32], index: 17, kind: output, shape index: {0}]
  %s18 = inlined_call_operand.hbm [shape: f32[2,8,32], index: 18, kind: output, shape index: {1}]
  %s19 = inlined_call_operand.hbm [shape: f32[2,8,32], index: 19, kind: output, shape index: {2}]
  %20 = xla_tuple %s17, %s18, %s19
  %s21 = sld [smem:[#allocation0]]
  $region114: #{tpu_custom_call.1} parent=0
    _
  %s23 = ssub.s32 1, %s21
  %s24 = scalar_select 0, %s23, %s21
  $region1: #{tpu_custom_call.1} parent=0
    #allocation2 [shape = 'u8[8192]{0}', space=vmem, size = 0x2000, scoped, tag = 'input window, operand 5, single buffered']
    #allocation3 [shape = 's32[1]{0}', space=sflag, size = 0x4, scoped, tag = 'scoped memory for tpu_custom_call.1']
    #allocation4 [shape = 's32[1]{0}', space=sflag, size = 0x4, scoped, tag = 'scoped memory for tpu_custom_call.1']
    #allocation5 [shape = 'u8[512]{0}', space=vmem, size = 0x400, scoped, tag = 'input window, operand 6, single buffered']
    #allocation6 [shape = 's32[1]{0}', space=sflag, size = 0x4, scoped, tag = 'scoped memory for tpu_custom_call.1']
    #allocation7 [shape = 'u8[8192]{0}', space=vmem, size = 0x2000, scoped, tag = 'input window, operand 7, single buffered']
    #allocation8 [shape = 'u8[512]{0}', space=vmem, size = 0x400, scoped, tag = 'input window, operand 8, single buffered']
    #allocation9 [shape = 's32[1]{0}', space=sflag, size = 0x4, scoped, tag = 'scoped memory for tpu_custom_call.1']
    #allocation10 [shape = 'u8[512]{0}', space=vmem, size = 0x400, scoped, tag = 'input window, operand 9, single buffered']
    #allocation11 [shape = 'u8[8192]{0}', space=vmem, size = 0x2000, scoped, tag = 'output window, operand 0, single buffered']
    #allocation12 [shape = 'u8[8192]{0}', space=vmem, size = 0x2000, scoped, tag = 'output window, operand 1, single buffered']
    #allocation13 [shape = 's32[1]{0}', space=sflag, size = 0x4, scoped, tag = 'scoped memory for tpu_custom_call.1']
    #allocation14 [shape = 'u8[8192]{0}', space=vmem, size = 0x2000, scoped, tag = 'output window, operand 2, single buffered']
    %25 = vsyncpa [#allocation3], 0
    %26 = vsyncpa [#allocation6], 0
    %27 = vsyncpa [#allocation9], 0
    %28 = vsyncpa [#allocation4], 0
    %29 = vsyncpa [#allocation13], 0
    // Predicated region
    $region2: #{tpu_custom_call.1} parent=1 // pred_check
      _
    $region3: #{tpu_custom_call.1} parent=1 // pred_check_branch
      %31 = sbr.rel (0) target = $region5
    $region4: #{tpu_custom_call.1} parent=1 // pred_region
      _
    $region5: #{tpu_custom_call.1} parent=1 // pred_fallthru
      _
    // Predicated region
    $region6: #{tpu_custom_call.1} parent=1 // pred_check
      _
    $region7: #{tpu_custom_call.1} parent=1 // pred_check_branch
      %33 = sbr.rel (0) target = $region9
    $region8: #{tpu_custom_call.1} parent=1 // pred_region
      _
    $region9: #{tpu_custom_call.1} parent=1 // pred_fallthru
      _
    // Predicated region
    $region10: #{tpu_custom_call.1} parent=1 // pred_check
      _
    $region11: #{tpu_custom_call.1} parent=1 // pred_check_branch
      %35 = sbr.rel (0) target = $region13
    $region12: #{tpu_custom_call.1} parent=1 // pred_region
      _
    $region13: #{tpu_custom_call.1} parent=1 // pred_fallthru
      _
    // Predicated region
    $region14: #{tpu_custom_call.1} parent=1 // pred_check
      _
    $region15: #{tpu_custom_call.1} parent=1 // pred_check_branch
      %37 = sbr.rel (0) target = $region17
    $region16: #{tpu_custom_call.1} parent=1 // pred_region
      _
    $region17: #{tpu_custom_call.1} parent=1 // pred_fallthru
      _
    // Predicated region
    $region18: #{tpu_custom_call.1} parent=1 // pred_check
      _
    $region19: #{tpu_custom_call.1} parent=1 // pred_check_branch
      %39 = sbr.rel (0) target = $region21
    $region20: #{tpu_custom_call.1} parent=1 // pred_region
      _
    $region21: #{tpu_custom_call.1} parent=1 // pred_fallthru
      _
    // Predicated region
    $region22: #{tpu_custom_call.1} parent=1 // pred_check
      _
    $region23: #{tpu_custom_call.1} parent=1 // pred_check_branch
      %41 = sbr.rel (0) target = $region25
    $region24: #{tpu_custom_call.1} parent=1 // pred_region
      %s43 = ssub.s32 256, 256
      %44 = vsyncadd [#allocation3], %s43
      %s45 = sshll.u32 [#allocation2], 4
      %s46 = int_to_ptr.vmem [resolvable:$true] %s45
      %51 = dma.hbm_to_vmem [thread:$0]  %s5, 256, %s46, [#allocation3], 64, 64, 4
    $region25: #{tpu_custom_call.1} parent=1 // pred_fallthru
      _
    // Predicated region
    $region26: #{tpu_custom_call.1} parent=1 // pred_check
      _
    $region27: #{tpu_custom_call.1} parent=1 // pred_check_branch
      %53 = sbr.rel (0) target = $region29
    $region28: #{tpu_custom_call.1} parent=1 // pred_region
      %s55 = ssub.s32 16, 16
      %56 = vsyncadd [#allocation6], %s55
      %s58 = sshll.u32 [#allocation5], 4
      %s59 = int_to_ptr.vmem [resolvable:$true] %s58
      %61 = dma.hbm_to_vmem [thread:$0]  %s6, 16, %s59, [#allocation6]
    $region29: #{tpu_custom_call.1} parent=1 // pred_fallthru
      _
    // Predicated region
    $region30: #{tpu_custom_call.1} parent=1 // pred_check
      _
    $region31: #{tpu_custom_call.1} parent=1 // pred_check_branch
      %63 = sbr.rel (0) target = $region33
    $region32: #{tpu_custom_call.1} parent=1 // pred_region
      %s65 = ssub.s32 256, 256
      %66 = vsyncadd [#allocation6], %s65
      %s67 = sshll.u32 [#allocation7], 4
      %s68 = int_to_ptr.vmem [resolvable:$true] %s67
      %73 = dma.hbm_to_vmem [thread:$0]  %s7, 256, %s68, [#allocation6], 64, 64, 4
    $region33: #{tpu_custom_call.1} parent=1 // pred_fallthru
      _
    // Predicated region
    $region34: #{tpu_custom_call.1} parent=1 // pred_check
      _
    $region35: #{tpu_custom_call.1} parent=1 // pred_check_branch
      %75 = sbr.rel (0) target = $region37
    $region36: #{tpu_custom_call.1} parent=1 // pred_region
      %s77 = ssub.s32 16, 16
      %78 = vsyncadd [#allocation9], %s77
      %s80 = sshll.u32 [#allocation8], 4
      %s81 = int_to_ptr.vmem [resolvable:$true] %s80
      %83 = dma.hbm_to_vmem [thread:$0]  %s8, 16, %s81, [#allocation9]
    $region37: #{tpu_custom_call.1} parent=1 // pred_fallthru
      _
    // Predicated region
    $region38: #{tpu_custom_call.1} parent=1 // pred_check
      _
    $region39: #{tpu_custom_call.1} parent=1 // pred_check_branch
      %85 = sbr.rel (0) target = $region41
    $region40: #{tpu_custom_call.1} parent=1 // pred_region
      %s87 = ssub.s32 16, 16
      %88 = vsyncadd [#allocation9], %s87
      %s90 = sshll.u32 [#allocation10], 4
      %s91 = int_to_ptr.vmem [resolvable:$true] %s90
      %93 = dma.hbm_to_vmem [thread:$0]  %s9, 16, %s91, [#allocation9]
    $region41: #{tpu_custom_call.1} parent=1 // pred_fallthru
      _
    // Predicated region
    $region42: #{tpu_custom_call.1} parent=1 // pred_check
      _
    $region43: #{tpu_custom_call.1} parent=1 // pred_check_branch
      %95 = sbr.rel (0) target = $region45
    $region44: #{tpu_custom_call.1} parent=1 // pred_region
      _
    $region45: #{tpu_custom_call.1} parent=1 // pred_fallthru
      _
    // Predicated region
    $region46: #{tpu_custom_call.1} parent=1 // pred_check
      _
    $region47: #{tpu_custom_call.1} parent=1 // pred_check_branch
      %97 = sbr.rel (0) target = $region49
    $region48: #{tpu_custom_call.1} parent=1 // pred_region
      _
    $region49: #{tpu_custom_call.1} parent=1 // pred_fallthru
      _
    // Predicated region
    $region50: #{tpu_custom_call.1} parent=1 // pred_check
      _
    $region51: #{tpu_custom_call.1} parent=1 // pred_check_branch
      %99 = sbr.rel (0) target = $region53
    $region52: #{tpu_custom_call.1} parent=1 // pred_region
      _
    $region53: #{tpu_custom_call.1} parent=1 // pred_fallthru
      _
    // Predicated region
    $region54: #{tpu_custom_call.1} parent=1 // pred_check
      _
    $region55: #{tpu_custom_call.1} parent=1 // pred_check_branch
      %101 = sbr.rel (0) target = $region57
    $region56: #{tpu_custom_call.1} parent=1 // pred_region
      _
    $region57: #{tpu_custom_call.1} parent=1 // pred_fallthru
      _
    // Predicated region
    $region58: #{tpu_custom_call.1} parent=1 // pred_check
      _
    $region59: #{tpu_custom_call.1} parent=1 // pred_check_branch
      %103 = sbr.rel (0) target = $region61
    $region60: #{tpu_custom_call.1} parent=1 // pred_region
      _
    $region61: #{tpu_custom_call.1} parent=1 // pred_fallthru
      _
    // Predicated region
    $region62: #{tpu_custom_call.1} parent=1 // pred_check
      _
    $region63: #{tpu_custom_call.1} parent=1 // pred_check_branch
      %105 = sbr.rel (0) target = $region65
    $region64: #{tpu_custom_call.1} parent=1 // pred_region
      _
    $region65: #{tpu_custom_call.1} parent=1 // pred_fallthru
      _
    // Predicated region
    $region66: #{tpu_custom_call.1} parent=1 // pred_check
      _
    $region67: #{tpu_custom_call.1} parent=1 // pred_check_branch
      %107 = sbr.rel (0) target = $region69
    $region68: #{tpu_custom_call.1} parent=1 // pred_region
      _
    $region69: #{tpu_custom_call.1} parent=1 // pred_fallthru
      _
    // Predicated region
    $region70: #{tpu_custom_call.1} parent=1 // pred_check
      _
    $region71: #{tpu_custom_call.1} parent=1 // pred_check_branch
      %109 = sbr.rel (0) target = $region73
    $region72: #{tpu_custom_call.1} parent=1 // pred_region
      %110 = dma.done [#allocation3], 256
    $region73: #{tpu_custom_call.1} parent=1 // pred_fallthru
      _
    // Predicated region
    $region74: #{tpu_custom_call.1} parent=1 // pred_check
      _
    $region75: #{tpu_custom_call.1} parent=1 // pred_check_branch
      %112 = sbr.rel (0) target = $region77
    $region76: #{tpu_custom_call.1} parent=1 // pred_region
      %113 = dma.done [#allocation6], 16
    $region77: #{tpu_custom_call.1} parent=1 // pred_fallthru
      _
    // Predicated region
    $region78: #{tpu_custom_call.1} parent=1 // pred_check
      _
    $region79: #{tpu_custom_call.1} parent=1 // pred_check_branch
      %115 = sbr.rel (0) target = $region81
    $region80: #{tpu_custom_call.1} parent=1 // pred_region
      %116 = dma.done [#allocation6], 256
    $region81: #{tpu_custom_call.1} parent=1 // pred_fallthru
      _
    // Predicated region
    $region82: #{tpu_custom_call.1} parent=1 // pred_check
      _
    $region83: #{tpu_custom_call.1} parent=1 // pred_check_branch
      %118 = sbr.rel (0) target = $region85
    $region84: #{tpu_custom_call.1} parent=1 // pred_region
      %119 = dma.done [#allocation9], 16
    $region85: #{tpu_custom_call.1} parent=1 // pred_fallthru
      _
    // Predicated region
    $region86: #{tpu_custom_call.1} parent=1 // pred_check
      _
    $region87: #{tpu_custom_call.1} parent=1 // pred_check_branch
      %121 = sbr.rel (0) target = $region89
    $region88: #{tpu_custom_call.1} parent=1 // pred_region
      %122 = dma.done [#allocation9], 16
    $region89: #{tpu_custom_call.1} parent=1 // pred_fallthru
      _
    %v124 = vld [vmem:[%s0] sm:$0xff]
    %v125 = vld [vmem:[%s0 + $0x8] sm:$0xff]
    %v126 = vpack.c.bf16 %v125, %v124
    %v127 = vld [vmem:[%s1] sm:$0xf]
    %v128 = vld [vmem:[%s1 + $0x4] sm:$0xf]
    %v129 = vld [vmem:[%s1 + $0x8] sm:$0xf]
    %v130 = vld [vmem:[%s1 + $0xc] sm:$0xf]
    %v131 = vld [vmem:[%s2] sm:$0x1]
    %v133 = vlaneseq
    %v134 = vshrl.u32 %v133, 7
    %v135 = vsub.s32 0, %v134
    %v136 = vrot.slane %v131, %v135
    %v142 = vunpack.c.l.b16 %v127
    %v143 = vunpack.c.l.b16 %v128
    %v144 = vunpack.c.l.b16 %v129
    %v145 = vunpack.c.l.b16 %v130
    %v146 = vpack.c.b16 %v143, %v142
    %v147 = vpack.c.b16 %v145, %v144
    %vm150 = vcmask 261120
    %v152 = vsel %vm150, %v126, 0
    %154 = vmatprep.subr.bf16.mxu0 0
    %155 = vmatpush1.bf16.msra.mxu0 %v146
    %156 = vmatprep.subr.bf16.mxu0 0
    %157 = vmatpush1.bf16.msra.mxu0 %v147
    %158 = vmatprep.subr.bf16.mxu0 0
    %159 = vmatpush1.bf16.msra.mxu0 0
    %160 = vmatprep.subr.bf16.mxu0 0
    %161 = vmatpush1.bf16.msra.mxu0 0
    %162 = vmatprep.subr.bf16.mxu0 0
    %163 = vmatpush1.bf16.msra.mxu0 0
    %164 = vmatprep.subr.bf16.mxu0 0
    %165 = vmatpush1.bf16.msra.mxu0 0
    %166 = vmatprep.subr.bf16.mxu0 0
    %167 = vmatpush1.bf16.msra.mxu0 0
    %168 = vmatprep.subr.bf16.mxu0 0
    %169 = vmatpush1.bf16.msra.mxu0 0
    %170 = vmatprep.subr.bf16.mxu0 0
    %171 = vmatpush1.bf16.msra.mxu0 0
    %172 = vmatprep.subr.bf16.mxu0 0
    %173 = vmatpush1.bf16.msra.mxu0 0
    %174 = vmatprep.subr.bf16.mxu0 0
    %175 = vmatpush1.bf16.msra.mxu0 0
    %176 = vmatprep.subr.bf16.mxu0 0
    %177 = vmatpush1.bf16.msra.mxu0 0
    %178 = vmatprep.subr.bf16.mxu0 0
    %179 = vmatpush1.bf16.msra.mxu0 0
    %180 = vmatprep.subr.bf16.mxu0 0
    %181 = vmatpush1.bf16.msra.mxu0 0
    %182 = vmatprep.subr.bf16.mxu0 0
    %183 = vmatpush1.bf16.msra.mxu0 0
    %184 = vmatprep.subr.bf16.mxu0 0
    %185 = vmatpush1.bf16.msra.mxu0 0
    %186 = vmatprep.mubr.bf16.mxu0 0
    %187 = vmatmul.mubr.bf16.gmra.mrb[0].mxu0 %v152
    %v188 = vpop.f32.mrb[0].mxu0
    %v189 = vadd.f32 %v136, %v188
    %v190 = vpop.f32.mrb[0].mxu0
    %v191 = vpop.f32.mrb[0].mxu0
    %v192 = vadd.f32 %v136, %v191
    %v193 = vpop.f32.mrb[0].mxu0
    %194 = vdwg.mxu0
    %v195 = vld [vmem:[%s3] sm:$0xf]
    %v196 = vld [vmem:[%s3 + $0x4] sm:$0xf]
    %v197 = vld [vmem:[%s3 + $0x8] sm:$0xf]
    %v198 = vld [vmem:[%s3 + $0xc] sm:$0xf]
    %v199 = vld [vmem:[%s4] sm:$0x1]
    %v201 = vlaneseq
    %v202 = vshrl.u32 %v201, 7
    %v203 = vsub.s32 0, %v202
    %v204 = vrot.slane %v199, %v203
    %v210 = vunpack.c.l.b16 %v195
    %v211 = vunpack.c.l.b16 %v196
    %v212 = vunpack.c.l.b16 %v197
    %v213 = vunpack.c.l.b16 %v198
    %v214 = vpack.c.b16 %v211, %v210
    %v215 = vpack.c.b16 %v213, %v212
    %218 = vmatprep.subr.bf16.mxu0 0
    %219 = vmatpush1.bf16.msra.mxu0 %v214
    %220 = vmatprep.subr.bf16.mxu0 0
    %221 = vmatpush1.bf16.msra.mxu0 %v215
    %222 = vmatprep.subr.bf16.mxu0 0
    %223 = vmatpush1.bf16.msra.mxu0 0
    %224 = vmatprep.subr.bf16.mxu0 0
    %225 = vmatpush1.bf16.msra.mxu0 0
    %226 = vmatprep.subr.bf16.mxu0 0
    %227 = vmatpush1.bf16.msra.mxu0 0
    %228 = vmatprep.subr.bf16.mxu0 0
    %229 = vmatpush1.bf16.msra.mxu0 0
    %230 = vmatprep.subr.bf16.mxu0 0
    %231 = vmatpush1.bf16.msra.mxu0 0
    %232 = vmatprep.subr.bf16.mxu0 0
    %233 = vmatpush1.bf16.msra.mxu0 0
    %234 = vmatprep.subr.bf16.mxu0 0
    %235 = vmatpush1.bf16.msra.mxu0 0
    %236 = vmatprep.subr.bf16.mxu0 0
    %237 = vmatpush1.bf16.msra.mxu0 0
    %238 = vmatprep.subr.bf16.mxu0 0
    %239 = vmatpush1.bf16.msra.mxu0 0
    %240 = vmatprep.subr.bf16.mxu0 0
    %241 = vmatpush1.bf16.msra.mxu0 0
    %242 = vmatprep.subr.bf16.mxu0 0
    %243 = vmatpush1.bf16.msra.mxu0 0
    %244 = vmatprep.subr.bf16.mxu0 0
    %245 = vmatpush1.bf16.msra.mxu0 0
    %246 = vmatprep.subr.bf16.mxu0 0
    %247 = vmatpush1.bf16.msra.mxu0 0
    %248 = vmatprep.subr.bf16.mxu0 0
    %249 = vmatpush1.bf16.msra.mxu0 0
    %250 = vmatprep.mubr.bf16.mxu0 0
    %251 = vmatmul.mubr.bf16.gmra.mrb[0].mxu0 %v152
    %v252 = vpop.f32.mrb[0].mxu0
    %v253 = vadd.f32 %v204, %v252
    %v254 = vpop.f32.mrb[0].mxu0
    %v255 = vpop.f32.mrb[0].mxu0
    %v256 = vadd.f32 %v204, %v255
    %v257 = vpop.f32.mrb[0].mxu0
    %258 = vdwg.mxu0
    %v259 = vld [vmem:[#allocation2] sm:$0xf]
    %v260 = vld [vmem:[#allocation2 + $0x4] sm:$0xf]
    %v261 = vld [vmem:[#allocation2 + $0x8] sm:$0xf]
    %v262 = vld [vmem:[#allocation2 + $0xc] sm:$0xf]
    %v263 = vld [vmem:[#allocation5] sm:$0x1]
    %v265 = vlaneseq
    %v266 = vshrl.u32 %v265, 7
    %v267 = vsub.s32 0, %v266
    %v268 = vrot.slane %v263, %v267
    %v274 = vunpack.c.l.b16 %v259
    %v275 = vunpack.c.l.b16 %v260
    %v276 = vunpack.c.l.b16 %v261
    %v277 = vunpack.c.l.b16 %v262
    %v278 = vpack.c.b16 %v275, %v274
    %v279 = vpack.c.b16 %v277, %v276
    %282 = vmatprep.subr.bf16.mxu0 0
    %283 = vmatpush1.bf16.msra.mxu0 %v278
    %284 = vmatprep.subr.bf16.mxu0 0
    %285 = vmatpush1.bf16.msra.mxu0 %v279
    %286 = vmatprep.subr.bf16.mxu0 0
    %287 = vmatpush1.bf16.msra.mxu0 0
    %288 = vmatprep.subr.bf16.mxu0 0
    %289 = vmatpush1.bf16.msra.mxu0 0
    %290 = vmatprep.subr.bf16.mxu0 0
    %291 = vmatpush1.bf16.msra.mxu0 0
    %292 = vmatprep.subr.bf16.mxu0 0
    %293 = vmatpush1.bf16.msra.mxu0 0
    %294 = vmatprep.subr.bf16.mxu0 0
    %295 = vmatpush1.bf16.msra.mxu0 0
    %296 = vmatprep.subr.bf16.mxu0 0
    %297 = vmatpush1.bf16.msra.mxu0 0
    %298 = vmatprep.subr.bf16.mxu0 0
    %299 = vmatpush1.bf16.msra.mxu0 0
    %300 = vmatprep.subr.bf16.mxu0 0
    %301 = vmatpush1.bf16.msra.mxu0 0
    %302 = vmatprep.subr.bf16.mxu0 0
    %303 = vmatpush1.bf16.msra.mxu0 0
    %304 = vmatprep.subr.bf16.mxu0 0
    %305 = vmatpush1.bf16.msra.mxu0 0
    %306 = vmatprep.subr.bf16.mxu0 0
    %307 = vmatpush1.bf16.msra.mxu0 0
    %308 = vmatprep.subr.bf16.mxu0 0
    %309 = vmatpush1.bf16.msra.mxu0 0
    %310 = vmatprep.subr.bf16.mxu0 0
    %311 = vmatpush1.bf16.msra.mxu0 0
    %312 = vmatprep.subr.bf16.mxu0 0
    %313 = vmatpush1.bf16.msra.mxu0 0
    %314 = vmatprep.mubr.bf16.mxu0 0
    %315 = vmatmul.mubr.bf16.gmra.mrb[0].mxu0 %v152
    %v316 = vpop.f32.mrb[0].mxu0
    %v317 = vadd.f32 %v268, %v316
    %v318 = vpop.f32.mrb[0].mxu0
    %v319 = vpop.f32.mrb[0].mxu0
    %v320 = vadd.f32 %v268, %v319
    %v321 = vpop.f32.mrb[0].mxu0
    %322 = vdwg.mxu0
    %323 = vst.msk [vmem:[#allocation12] sm:$0xff] %vm150, %v253
    %324 = vst.msk [vmem:[#allocation12 + $0x8] sm:$0xff] %vm150, %v256
    %325 = vst.msk [vmem:[#allocation14] sm:$0xff] %vm150, %v317
    %326 = vst.msk [vmem:[#allocation14 + $0x8] sm:$0xff] %vm150, %v320
    %v327 = vmul.f32 %v189, 0.35355338
    %v328 = vmul.f32 %v192, 0.35355338
    %v329 = vpack.c.bf16 %v327, %v327
    %v330 = vpack.c.bf16 %v328, %v328
    %v331 = vpack.c.bf16 %v253, %v253
    %v332 = vpack.c.bf16 %v256, %v256
    %v333 = vpack.c.bf16 %v317, %v317
    %v334 = vpack.c.bf16 %v320, %v320
    %vm335 = vcmask 64512
    %v337 = vsel %vm335, %v329, 0
    %v340 = vsel %vm335, %v331, 0
    %342 = vmatprep.subr.bf16.mxu0 0
    %343 = vmatpush1.bf16.xpose.msra.mxu0 %v340
    %344 = vmatprep.subr.bf16.mxu0 0
    %345 = vmatpush1.bf16.xpose.msra.mxu0 0
    %346 = vmatprep.subr.bf16.mxu0 0
    %347 = vmatpush1.bf16.xpose.msra.mxu0 0
    %348 = vmatprep.subr.bf16.mxu0 0
    %349 = vmatpush1.bf16.xpose.msra.mxu0 0
    %350 = vmatprep.subr.bf16.mxu0 0
    %351 = vmatpush1.bf16.xpose.msra.mxu0 0
    %352 = vmatprep.subr.bf16.mxu0 0
    %353 = vmatpush1.bf16.xpose.msra.mxu0 0
    %354 = vmatprep.subr.bf16.mxu0 0
    %355 = vmatpush1.bf16.xpose.msra.mxu0 0
    %356 = vmatprep.subr.bf16.mxu0 0
    %357 = vmatpush1.bf16.xpose.msra.mxu0 0
    %358 = vmatprep.subr.bf16.mxu0 0
    %359 = vmatpush1.bf16.xpose.msra.mxu0 0
    %360 = vmatprep.subr.bf16.mxu0 0
    %361 = vmatpush1.bf16.xpose.msra.mxu0 0
    %362 = vmatprep.subr.bf16.mxu0 0
    %363 = vmatpush1.bf16.xpose.msra.mxu0 0
    %364 = vmatprep.subr.bf16.mxu0 0
    %365 = vmatpush1.bf16.xpose.msra.mxu0 0
    %366 = vmatprep.subr.bf16.mxu0 0
    %367 = vmatpush1.bf16.xpose.msra.mxu0 0
    %368 = vmatprep.subr.bf16.mxu0 0
    %369 = vmatpush1.bf16.xpose.msra.mxu0 0
    %370 = vmatprep.subr.bf16.mxu0 0
    %371 = vmatpush1.bf16.xpose.msra.mxu0 0
    %372 = vmatprep.subr.bf16.mxu0 0
    %373 = vmatpush1.bf16.xpose.msra.mxu0 0
    %374 = vmatprep.mubr.bf16.mxu0 0
    %375 = vmatmul.mubr.bf16.gmra.mrb[0].mxu0 %v337
    %v376 = vpop.f32.mrb[0].mxu0
    %v377 = vadd.f32 0.0, %v376
    %v378 = vpop.f32.mrb[0].mxu0
    %v379 = vpop.f32.mrb[0].mxu0
    %v380 = vpop.f32.mrb[0].mxu0
    %381 = vdwg.mxu0
    %v383 = vsel %vm335, %v330, 0
    %v386 = vsel %vm335, %v332, 0
    %388 = vmatprep.subr.bf16.mxu0 0
    %389 = vmatpush1.bf16.xpose.msra.mxu0 %v386
    %390 = vmatprep.subr.bf16.mxu0 0
    %391 = vmatpush1.bf16.xpose.msra.mxu0 0
    %392 = vmatprep.subr.bf16.mxu0 0
    %393 = vmatpush1.bf16.xpose.msra.mxu0 0
    %394 = vmatprep.subr.bf16.mxu0 0
    %395 = vmatpush1.bf16.xpose.msra.mxu0 0
    %396 = vmatprep.subr.bf16.mxu0 0
    %397 = vmatpush1.bf16.xpose.msra.mxu0 0
    %398 = vmatprep.subr.bf16.mxu0 0
    %399 = vmatpush1.bf16.xpose.msra.mxu0 0
    %400 = vmatprep.subr.bf16.mxu0 0
    %401 = vmatpush1.bf16.xpose.msra.mxu0 0
    %402 = vmatprep.subr.bf16.mxu0 0
    %403 = vmatpush1.bf16.xpose.msra.mxu0 0
    %404 = vmatprep.subr.bf16.mxu0 0
    %405 = vmatpush1.bf16.xpose.msra.mxu0 0
    %406 = vmatprep.subr.bf16.mxu0 0
    %407 = vmatpush1.bf16.xpose.msra.mxu0 0
    %408 = vmatprep.subr.bf16.mxu0 0
    %409 = vmatpush1.bf16.xpose.msra.mxu0 0
    %410 = vmatprep.subr.bf16.mxu0 0
    %411 = vmatpush1.bf16.xpose.msra.mxu0 0
    %412 = vmatprep.subr.bf16.mxu0 0
    %413 = vmatpush1.bf16.xpose.msra.mxu0 0
    %414 = vmatprep.subr.bf16.mxu0 0
    %415 = vmatpush1.bf16.xpose.msra.mxu0 0
    %416 = vmatprep.subr.bf16.mxu0 0
    %417 = vmatpush1.bf16.xpose.msra.mxu0 0
    %418 = vmatprep.subr.bf16.mxu0 0
    %419 = vmatpush1.bf16.xpose.msra.mxu0 0
    %420 = vmatprep.mubr.bf16.mxu0 0
    %421 = vmatmul.mubr.bf16.gmra.mrb[0].mxu0 %v383
    %v422 = vpop.f32.mrb[0].mxu0
    %v423 = vadd.f32 0.0, %v422
    %v424 = vpop.f32.mrb[0].mxu0
    %v425 = vpop.f32.mrb[0].mxu0
    %v426 = vpop.f32.mrb[0].mxu0
    %427 = vdwg.mxu0
    %v428 = vsel %vm335, %v377, -inf
    %429 = vmax.xlane.f32.xlu0 %v428
    %v430 = vpop.xlane.xlu0 %429
    %v431 = vsel %vm335, %v423, -inf
    %432 = vmax.xlane.f32.xlu0 %v431
    %v433 = vpop.xlane.xlu0 %432
    %v434 = vsub.f32 %v377, %v430
    %v435 = vsub.f32 %v423, %v433
    %v436 = vmul.f32 %v434, 1.442695
    %v437 = vpow.pop %v436
    %v438 = vmul.f32 %v435, 1.442695
    %v439 = vpow.pop %v438
    %v440 = vsel %vm335, %v437, 0.0
    %441 = vadd.xlane.f32.xlu0 %v440
    %v442 = vpop.xlane.xlu0 %441
    %v443 = vsel %vm335, %v439, 0.0
    %444 = vadd.xlane.f32.xlu0 %v443
    %v445 = vpop.xlane.xlu0 %444
    %v446 = vrcp.pop %v442
    %v447 = vrcp.pop %v445
    %v448 = vmul.f32 %v437, %v446
    %v449 = vmul.f32 %v439, %v447
    %v450 = vpack.c.bf16 %v448, %v448
    %v451 = vpack.c.bf16 %v449, %v449
    %v453 = vsel %vm335, %v450, 0
    %vm455 = vcmask 1043456
    %v457 = vsel %vm455, %v333, 0
    %459 = vmatprep.subr.bf16.mxu0 0
    %460 = vmatpush1.bf16.msra.mxu0 %v457
    %461 = vmatprep.subr.bf16.mxu0 0
    %462 = vmatpush1.bf16.msra.mxu0 0
    %463 = vmatprep.subr.bf16.mxu0 0
    %464 = vmatpush1.bf16.msra.mxu0 0
    %465 = vmatprep.subr.bf16.mxu0 0
    %466 = vmatpush1.bf16.msra.mxu0 0
    %467 = vmatprep.subr.bf16.mxu0 0
    %468 = vmatpush1.bf16.msra.mxu0 0
    %469 = vmatprep.subr.bf16.mxu0 0
    %470 = vmatpush1.bf16.msra.mxu0 0
    %471 = vmatprep.subr.bf16.mxu0 0
    %472 = vmatpush1.bf16.msra.mxu0 0
    %473 = vmatprep.subr.bf16.mxu0 0
    %474 = vmatpush1.bf16.msra.mxu0 0
    %475 = vmatprep.subr.bf16.mxu0 0
    %476 = vmatpush1.bf16.msra.mxu0 0
    %477 = vmatprep.subr.bf16.mxu0 0
    %478 = vmatpush1.bf16.msra.mxu0 0
    %479 = vmatprep.subr.bf16.mxu0 0
    %480 = vmatpush1.bf16.msra.mxu0 0
    %481 = vmatprep.subr.bf16.mxu0 0
    %482 = vmatpush1.bf16.msra.mxu0 0
    %483 = vmatprep.subr.bf16.mxu0 0
    %484 = vmatpush1.bf16.msra.mxu0 0
    %485 = vmatprep.subr.bf16.mxu0 0
    %486 = vmatpush1.bf16.msra.mxu0 0
    %487 = vmatprep.subr.bf16.mxu0 0
    %488 = vmatpush1.bf16.msra.mxu0 0
    %489 = vmatprep.subr.bf16.mxu0 0
    %490 = vmatpush1.bf16.msra.mxu0 0
    %491 = vmatprep.mubr.bf16.mxu0 0
    %492 = vmatmul.mubr.bf16.gmra.mrb[0].mxu0 %v453
    %v493 = vpop.f32.mrb[0].mxu0
    %v494 = vadd.f32 0.0, %v493
    %v495 = vpop.f32.mrb[0].mxu0
    %v496 = vpop.f32.mrb[0].mxu0
    %v497 = vpop.f32.mrb[0].mxu0
    %498 = vdwg.mxu0
    %v500 = vsel %vm335, %v451, 0
    %v503 = vsel %vm455, %v334, 0
    %505 = vmatprep.subr.bf16.mxu0 0
    %506 = vmatpush1.bf16.msra.mxu0 %v503
    %507 = vmatprep.subr.bf16.mxu0 0
    %508 = vmatpush1.bf16.msra.mxu0 0
    %509 = vmatprep.subr.bf16.mxu0 0
    %510 = vmatpush1.bf16.msra.mxu0 0
    %511 = vmatprep.subr.bf16.mxu0 0
    %512 = vmatpush1.bf16.msra.mxu0 0
    %513 = vmatprep.subr.bf16.mxu0 0
    %514 = vmatpush1.bf16.msra.mxu0 0
    %515 = vmatprep.subr.bf16.mxu0 0
    %516 = vmatpush1.bf16.msra.mxu0 0
    %517 = vmatprep.subr.bf16.mxu0 0
    %518 = vmatpush1.bf16.msra.mxu0 0
    %519 = vmatprep.subr.bf16.mxu0 0
    %520 = vmatpush1.bf16.msra.mxu0 0
    %521 = vmatprep.subr.bf16.mxu0 0
    %522 = vmatpush1.bf16.msra.mxu0 0
    %523 = vmatprep.subr.bf16.mxu0 0
    %524 = vmatpush1.bf16.msra.mxu0 0
    %525 = vmatprep.subr.bf16.mxu0 0
    %526 = vmatpush1.bf16.msra.mxu0 0
    %527 = vmatprep.subr.bf16.mxu0 0
    %528 = vmatpush1.bf16.msra.mxu0 0
    %529 = vmatprep.subr.bf16.mxu0 0
    %530 = vmatpush1.bf16.msra.mxu0 0
    %531 = vmatprep.subr.bf16.mxu0 0
    %532 = vmatpush1.bf16.msra.mxu0 0
    %533 = vmatprep.subr.bf16.mxu0 0
    %534 = vmatpush1.bf16.msra.mxu0 0
    %535 = vmatprep.subr.bf16.mxu0 0
    %536 = vmatpush1.bf16.msra.mxu0 0
    %537 = vmatprep.mubr.bf16.mxu0 0
    %538 = vmatmul.mubr.bf16.gmra.mrb[0].mxu0 %v500
    %v539 = vpop.f32.mrb[0].mxu0
    %v540 = vadd.f32 0.0, %v539
    %v541 = vpop.f32.mrb[0].mxu0
    %v542 = vpop.f32.mrb[0].mxu0
    %v543 = vpop.f32.mrb[0].mxu0
    %544 = vdwg.mxu0
    %546 = vrot.lane.b32.xlu0 %v329, 120
    %v547 = vpop.permute.xlu0 %546
    %549 = vrot.lane.b32.xlu0 %v331, 120
    %v550 = vpop.permute.xlu0 %549
    %v552 = vsel %vm335, %v547, 0
    %v555 = vsel %vm335, %v550, 0
    %557 = vmatprep.subr.bf16.mxu0 0
    %558 = vmatpush1.bf16.xpose.msra.mxu0 %v555
    %559 = vmatprep.subr.bf16.mxu0 0
    %560 = vmatpush1.bf16.xpose.msra.mxu0 0
    %561 = vmatprep.subr.bf16.mxu0 0
    %562 = vmatpush1.bf16.xpose.msra.mxu0 0
    %563 = vmatprep.subr.bf16.mxu0 0
    %564 = vmatpush1.bf16.xpose.msra.mxu0 0
    %565 = vmatprep.subr.bf16.mxu0 0
    %566 = vmatpush1.bf16.xpose.msra.mxu0 0
    %567 = vmatprep.subr.bf16.mxu0 0
    %568 = vmatpush1.bf16.xpose.msra.mxu0 0
    %569 = vmatprep.subr.bf16.mxu0 0
    %570 = vmatpush1.bf16.xpose.msra.mxu0 0
    %571 = vmatprep.subr.bf16.mxu0 0
    %572 = vmatpush1.bf16.xpose.msra.mxu0 0
    %573 = vmatprep.subr.bf16.mxu0 0
    %574 = vmatpush1.bf16.xpose.msra.mxu0 0
    %575 = vmatprep.subr.bf16.mxu0 0
    %576 = vmatpush1.bf16.xpose.msra.mxu0 0
    %577 = vmatprep.subr.bf16.mxu0 0
    %578 = vmatpush1.bf16.xpose.msra.mxu0 0
    %579 = vmatprep.subr.bf16.mxu0 0
    %580 = vmatpush1.bf16.xpose.msra.mxu0 0
    %581 = vmatprep.subr.bf16.mxu0 0
    %582 = vmatpush1.bf16.xpose.msra.mxu0 0
    %583 = vmatprep.subr.bf16.mxu0 0
    %584 = vmatpush1.bf16.xpose.msra.mxu0 0
    %585 = vmatprep.subr.bf16.mxu0 0
    %586 = vmatpush1.bf16.xpose.msra.mxu0 0
    %587 = vmatprep.subr.bf16.mxu0 0
    %588 = vmatpush1.bf16.xpose.msra.mxu0 0
    %589 = vmatprep.mubr.bf16.mxu0 0
    %590 = vmatmul.mubr.bf16.gmra.mrb[0].mxu0 %v552
    %v591 = vpop.f32.mrb[0].mxu0
    %v592 = vadd.f32 0.0, %v591
    %v593 = vpop.f32.mrb[0].mxu0
    %v594 = vpop.f32.mrb[0].mxu0
    %v595 = vpop.f32.mrb[0].mxu0
    %596 = vdwg.mxu0
    %598 = vrot.lane.b32.xlu0 %v330, 120
    %v599 = vpop.permute.xlu0 %598
    %601 = vrot.lane.b32.xlu0 %v332, 120
    %v602 = vpop.permute.xlu0 %601
    %v604 = vsel %vm335, %v599, 0
    %v607 = vsel %vm335, %v602, 0
    %609 = vmatprep.subr.bf16.mxu0 0
    %610 = vmatpush1.bf16.xpose.msra.mxu0 %v607
    %611 = vmatprep.subr.bf16.mxu0 0
    %612 = vmatpush1.bf16.xpose.msra.mxu0 0
    %613 = vmatprep.subr.bf16.mxu0 0
    %614 = vmatpush1.bf16.xpose.msra.mxu0 0
    %615 = vmatprep.subr.bf16.mxu0 0
    %616 = vmatpush1.bf16.xpose.msra.mxu0 0
    %617 = vmatprep.subr.bf16.mxu0 0
    %618 = vmatpush1.bf16.xpose.msra.mxu0 0
    %619 = vmatprep.subr.bf16.mxu0 0
    %620 = vmatpush1.bf16.xpose.msra.mxu0 0
    %621 = vmatprep.subr.bf16.mxu0 0
    %622 = vmatpush1.bf16.xpose.msra.mxu0 0
    %623 = vmatprep.subr.bf16.mxu0 0
    %624 = vmatpush1.bf16.xpose.msra.mxu0 0
    %625 = vmatprep.subr.bf16.mxu0 0
    %626 = vmatpush1.bf16.xpose.msra.mxu0 0
    %627 = vmatprep.subr.bf16.mxu0 0
    %628 = vmatpush1.bf16.xpose.msra.mxu0 0
    %629 = vmatprep.subr.bf16.mxu0 0
    %630 = vmatpush1.bf16.xpose.msra.mxu0 0
    %631 = vmatprep.subr.bf16.mxu0 0
    %632 = vmatpush1.bf16.xpose.msra.mxu0 0
    %633 = vmatprep.subr.bf16.mxu0 0
    %634 = vmatpush1.bf16.xpose.msra.mxu0 0
    %635 = vmatprep.subr.bf16.mxu0 0
    %636 = vmatpush1.bf16.xpose.msra.mxu0 0
    %637 = vmatprep.subr.bf16.mxu0 0
    %638 = vmatpush1.bf16.xpose.msra.mxu0 0
    %639 = vmatprep.subr.bf16.mxu0 0
    %640 = vmatpush1.bf16.xpose.msra.mxu0 0
    %641 = vmatprep.mubr.bf16.mxu0 0
    %642 = vmatmul.mubr.bf16.gmra.mrb[0].mxu0 %v604
    %v643 = vpop.f32.mrb[0].mxu0
    %v644 = vadd.f32 0.0, %v643
    %v645 = vpop.f32.mrb[0].mxu0
    %v646 = vpop.f32.mrb[0].mxu0
    %v647 = vpop.f32.mrb[0].mxu0
    %648 = vdwg.mxu0
    %v649 = vsel %vm335, %v592, -inf
    %650 = vmax.xlane.f32.xlu0 %v649
    %v651 = vpop.xlane.xlu0 %650
    %v652 = vsel %vm335, %v644, -inf
    %653 = vmax.xlane.f32.xlu0 %v652
    %v654 = vpop.xlane.xlu0 %653
    %v655 = vsub.f32 %v592, %v651
    %v656 = vsub.f32 %v644, %v654
    %v657 = vmul.f32 %v655, 1.442695
    %v658 = vpow.pop %v657
    %v659 = vmul.f32 %v656, 1.442695
    %v660 = vpow.pop %v659
    %v661 = vsel %vm335, %v658, 0.0
    %662 = vadd.xlane.f32.xlu0 %v661
    %v663 = vpop.xlane.xlu0 %662
    %v664 = vsel %vm335, %v660, 0.0
    %665 = vadd.xlane.f32.xlu0 %v664
    %v666 = vpop.xlane.xlu0 %665
    %v667 = vrcp.pop %v663
    %v668 = vrcp.pop %v666
    %v669 = vmul.f32 %v658, %v667
    %v670 = vmul.f32 %v660, %v668
    %v671 = vpack.c.bf16 %v669, %v669
    %v672 = vpack.c.bf16 %v670, %v670
    %674 = vrot.lane.b32.xlu0 %v333, 120
    %v675 = vpop.permute.xlu0 %674
    %v677 = vsel %vm335, %v671, 0
    %v680 = vsel %vm455, %v675, 0
    %682 = vmatprep.subr.bf16.mxu0 0
    %683 = vmatpush1.bf16.msra.mxu0 %v680
    %684 = vmatprep.subr.bf16.mxu0 0
    %685 = vmatpush1.bf16.msra.mxu0 0
    %686 = vmatprep.subr.bf16.mxu0 0
    %687 = vmatpush1.bf16.msra.mxu0 0
    %688 = vmatprep.subr.bf16.mxu0 0
    %689 = vmatpush1.bf16.msra.mxu0 0
    %690 = vmatprep.subr.bf16.mxu0 0
    %691 = vmatpush1.bf16.msra.mxu0 0
    %692 = vmatprep.subr.bf16.mxu0 0
    %693 = vmatpush1.bf16.msra.mxu0 0
    %694 = vmatprep.subr.bf16.mxu0 0
    %695 = vmatpush1.bf16.msra.mxu0 0
    %696 = vmatprep.subr.bf16.mxu0 0
    %697 = vmatpush1.bf16.msra.mxu0 0
    %698 = vmatprep.subr.bf16.mxu0 0
    %699 = vmatpush1.bf16.msra.mxu0 0
    %700 = vmatprep.subr.bf16.mxu0 0
    %701 = vmatpush1.bf16.msra.mxu0 0
    %702 = vmatprep.subr.bf16.mxu0 0
    %703 = vmatpush1.bf16.msra.mxu0 0
    %704 = vmatprep.subr.bf16.mxu0 0
    %705 = vmatpush1.bf16.msra.mxu0 0
    %706 = vmatprep.subr.bf16.mxu0 0
    %707 = vmatpush1.bf16.msra.mxu0 0
    %708 = vmatprep.subr.bf16.mxu0 0
    %709 = vmatpush1.bf16.msra.mxu0 0
    %710 = vmatprep.subr.bf16.mxu0 0
    %711 = vmatpush1.bf16.msra.mxu0 0
    %712 = vmatprep.subr.bf16.mxu0 0
    %713 = vmatpush1.bf16.msra.mxu0 0
    %714 = vmatprep.mubr.bf16.mxu0 0
    %715 = vmatmul.mubr.bf16.gmra.mrb[0].mxu0 %v677
    %v716 = vpop.f32.mrb[0].mxu0
    %v717 = vadd.f32 0.0, %v716
    %v718 = vpop.f32.mrb[0].mxu0
    %v719 = vpop.f32.mrb[0].mxu0
    %v720 = vpop.f32.mrb[0].mxu0
    %721 = vdwg.mxu0
    %723 = vrot.lane.b32.xlu0 %v334, 120
    %v724 = vpop.permute.xlu0 %723
    %v726 = vsel %vm335, %v672, 0
    %v729 = vsel %vm455, %v724, 0
    %731 = vmatprep.subr.bf16.mxu0 0
    %732 = vmatpush1.bf16.msra.mxu0 %v729
    %733 = vmatprep.subr.bf16.mxu0 0
    %734 = vmatpush1.bf16.msra.mxu0 0
    %735 = vmatprep.subr.bf16.mxu0 0
    %736 = vmatpush1.bf16.msra.mxu0 0
    %737 = vmatprep.subr.bf16.mxu0 0
    %738 = vmatpush1.bf16.msra.mxu0 0
    %739 = vmatprep.subr.bf16.mxu0 0
    %740 = vmatpush1.bf16.msra.mxu0 0
    %741 = vmatprep.subr.bf16.mxu0 0
    %742 = vmatpush1.bf16.msra.mxu0 0
    %743 = vmatprep.subr.bf16.mxu0 0
    %744 = vmatpush1.bf16.msra.mxu0 0
    %745 = vmatprep.subr.bf16.mxu0 0
    %746 = vmatpush1.bf16.msra.mxu0 0
    %747 = vmatprep.subr.bf16.mxu0 0
    %748 = vmatpush1.bf16.msra.mxu0 0
    %749 = vmatprep.subr.bf16.mxu0 0
    %750 = vmatpush1.bf16.msra.mxu0 0
    %751 = vmatprep.subr.bf16.mxu0 0
    %752 = vmatpush1.bf16.msra.mxu0 0
    %753 = vmatprep.subr.bf16.mxu0 0
    %754 = vmatpush1.bf16.msra.mxu0 0
    %755 = vmatprep.subr.bf16.mxu0 0
    %756 = vmatpush1.bf16.msra.mxu0 0
    %757 = vmatprep.subr.bf16.mxu0 0
    %758 = vmatpush1.bf16.msra.mxu0 0
    %759 = vmatprep.subr.bf16.mxu0 0
    %760 = vmatpush1.bf16.msra.mxu0 0
    %761 = vmatprep.subr.bf16.mxu0 0
    %762 = vmatpush1.bf16.msra.mxu0 0
    %763 = vmatprep.mubr.bf16.mxu0 0
    %764 = vmatmul.mubr.bf16.gmra.mrb[0].mxu0 %v726
    %v765 = vpop.f32.mrb[0].mxu0
    %v766 = vadd.f32 0.0, %v765
    %v767 = vpop.f32.mrb[0].mxu0
    %v768 = vpop.f32.mrb[0].mxu0
    %v769 = vpop.f32.mrb[0].mxu0
    %770 = vdwg.mxu0
    %771 = vrot.lane.b32.xlu0 %v329, 112
    %v772 = vpop.permute.xlu0 %771
    %773 = vrot.lane.b32.xlu0 %v331, 112
    %v774 = vpop.permute.xlu0 %773
    %v776 = vsel %vm335, %v772, 0
    %v779 = vsel %vm335, %v774, 0
    %781 = vmatprep.subr.bf16.mxu0 0
    %782 = vmatpush1.bf16.xpose.msra.mxu0 %v779
    %783 = vmatprep.subr.bf16.mxu0 0
    %784 = vmatpush1.bf16.xpose.msra.mxu0 0
    %785 = vmatprep.subr.bf16.mxu0 0
    %786 = vmatpush1.bf16.xpose.msra.mxu0 0
    %787 = vmatprep.subr.bf16.mxu0 0
    %788 = vmatpush1.bf16.xpose.msra.mxu0 0
    %789 = vmatprep.subr.bf16.mxu0 0
    %790 = vmatpush1.bf16.xpose.msra.mxu0 0
    %791 = vmatprep.subr.bf16.mxu0 0
    %792 = vmatpush1.bf16.xpose.msra.mxu0 0
    %793 = vmatprep.subr.bf16.mxu0 0
    %794 = vmatpush1.bf16.xpose.msra.mxu0 0
    %795 = vmatprep.subr.bf16.mxu0 0
    %796 = vmatpush1.bf16.xpose.msra.mxu0 0
    %797 = vmatprep.subr.bf16.mxu0 0
    %798 = vmatpush1.bf16.xpose.msra.mxu0 0
    %799 = vmatprep.subr.bf16.mxu0 0
    %800 = vmatpush1.bf16.xpose.msra.mxu0 0
    %801 = vmatprep.subr.bf16.mxu0 0
    %802 = vmatpush1.bf16.xpose.msra.mxu0 0
    %803 = vmatprep.subr.bf16.mxu0 0
    %804 = vmatpush1.bf16.xpose.msra.mxu0 0
    %805 = vmatprep.subr.bf16.mxu0 0
    %806 = vmatpush1.bf16.xpose.msra.mxu0 0
    %807 = vmatprep.subr.bf16.mxu0 0
    %808 = vmatpush1.bf16.xpose.msra.mxu0 0
    %809 = vmatprep.subr.bf16.mxu0 0
    %810 = vmatpush1.bf16.xpose.msra.mxu0 0
    %811 = vmatprep.subr.bf16.mxu0 0
    %812 = vmatpush1.bf16.xpose.msra.mxu0 0
    %813 = vmatprep.mubr.bf16.mxu0 0
    %814 = vmatmul.mubr.bf16.gmra.mrb[0].mxu0 %v776
    %v815 = vpop.f32.mrb[0].mxu0
    %v816 = vadd.f32 0.0, %v815
    %v817 = vpop.f32.mrb[0].mxu0
    %v818 = vpop.f32.mrb[0].mxu0
    %v819 = vpop.f32.mrb[0].mxu0
    %820 = vdwg.mxu0
    %821 = vrot.lane.b32.xlu0 %v330, 112
    %v822 = vpop.permute.xlu0 %821
    %823 = vrot.lane.b32.xlu0 %v332, 112
    %v824 = vpop.permute.xlu0 %823
    %v826 = vsel %vm335, %v822, 0
    %v829 = vsel %vm335, %v824, 0
    %831 = vmatprep.subr.bf16.mxu0 0
    %832 = vmatpush1.bf16.xpose.msra.mxu0 %v829
    %833 = vmatprep.subr.bf16.mxu0 0
    %834 = vmatpush1.bf16.xpose.msra.mxu0 0
    %835 = vmatprep.subr.bf16.mxu0 0
    %836 = vmatpush1.bf16.xpose.msra.mxu0 0
    %837 = vmatprep.subr.bf16.mxu0 0
    %838 = vmatpush1.bf16.xpose.msra.mxu0 0
    %839 = vmatprep.subr.bf16.mxu0 0
    %840 = vmatpush1.bf16.xpose.msra.mxu0 0
    %841 = vmatprep.subr.bf16.mxu0 0
    %842 = vmatpush1.bf16.xpose.msra.mxu0 0
    %843 = vmatprep.subr.bf16.mxu0 0
    %844 = vmatpush1.bf16.xpose.msra.mxu0 0
    %845 = vmatprep.subr.bf16.mxu0 0
    %846 = vmatpush1.bf16.xpose.msra.mxu0 0
    %847 = vmatprep.subr.bf16.mxu0 0
    %848 = vmatpush1.bf16.xpose.msra.mxu0 0
    %849 = vmatprep.subr.bf16.mxu0 0
    %850 = vmatpush1.bf16.xpose.msra.mxu0 0
    %851 = vmatprep.subr.bf16.mxu0 0
    %852 = vmatpush1.bf16.xpose.msra.mxu0 0
    %853 = vmatprep.subr.bf16.mxu0 0
    %854 = vmatpush1.bf16.xpose.msra.mxu0 0
    %855 = vmatprep.subr.bf16.mxu0 0
    %856 = vmatpush1.bf16.xpose.msra.mxu0 0
    %857 = vmatprep.subr.bf16.mxu0 0
    %858 = vmatpush1.bf16.xpose.msra.mxu0 0
    %859 = vmatprep.subr.bf16.mxu0 0
    %860 = vmatpush1.bf16.xpose.msra.mxu0 0
    %861 = vmatprep.subr.bf16.mxu0 0
    %862 = vmatpush1.bf16.xpose.msra.mxu0 0
    %863 = vmatprep.mubr.bf16.mxu0 0
    %864 = vmatmul.mubr.bf16.gmra.mrb[0].mxu0 %v826
    %v865 = vpop.f32.mrb[0].mxu0
    %v866 = vadd.f32 0.0, %v865
    %v867 = vpop.f32.mrb[0].mxu0
    %v868 = vpop.f32.mrb[0].mxu0
    %v869 = vpop.f32.mrb[0].mxu0
    %870 = vdwg.mxu0
    %v871 = vsel %vm335, %v816, -inf
    %872 = vmax.xlane.f32.xlu0 %v871
    %v873 = vpop.xlane.xlu0 %872
    %v874 = vsel %vm335, %v866, -inf
    %875 = vmax.xlane.f32.xlu0 %v874
    %v876 = vpop.xlane.xlu0 %875
    %v877 = vsub.f32 %v816, %v873
    %v878 = vsub.f32 %v866, %v876
    %v879 = vmul.f32 %v877, 1.442695
    %v880 = vpow.pop %v879
    %v881 = vmul.f32 %v878, 1.442695
    %v882 = vpow.pop %v881
    %v883 = vsel %vm335, %v880, 0.0
    %884 = vadd.xlane.f32.xlu0 %v883
    %v885 = vpop.xlane.xlu0 %884
    %v886 = vsel %vm335, %v882, 0.0
    %887 = vadd.xlane.f32.xlu0 %v886
    %v888 = vpop.xlane.xlu0 %887
    %v889 = vrcp.pop %v885
    %v890 = vrcp.pop %v888
    %v891 = vmul.f32 %v880, %v889
    %v892 = vmul.f32 %v882, %v890
    %v893 = vpack.c.bf16 %v891, %v891
    %v894 = vpack.c.bf16 %v892, %v892
    %895 = vrot.lane.b32.xlu0 %v333, 112
    %v896 = vpop.permute.xlu0 %895
    %v898 = vsel %vm335, %v893, 0
    %v901 = vsel %vm455, %v896, 0
    %903 = vmatprep.subr.bf16.mxu0 0
    %904 = vmatpush1.bf16.msra.mxu0 %v901
    %905 = vmatprep.subr.bf16.mxu0 0
    %906 = vmatpush1.bf16.msra.mxu0 0
    %907 = vmatprep.subr.bf16.mxu0 0
    %908 = vmatpush1.bf16.msra.mxu0 0
    %909 = vmatprep.subr.bf16.mxu0 0
    %910 = vmatpush1.bf16.msra.mxu0 0
    %911 = vmatprep.subr.bf16.mxu0 0
    %912 = vmatpush1.bf16.msra.mxu0 0
    %913 = vmatprep.subr.bf16.mxu0 0
    %914 = vmatpush1.bf16.msra.mxu0 0
    %915 = vmatprep.subr.bf16.mxu0 0
    %916 = vmatpush1.bf16.msra.mxu0 0
    %917 = vmatprep.subr.bf16.mxu0 0
    %918 = vmatpush1.bf16.msra.mxu0 0
    %919 = vmatprep.subr.bf16.mxu0 0
    %920 = vmatpush1.bf16.msra.mxu0 0
    %921 = vmatprep.subr.bf16.mxu0 0
    %922 = vmatpush1.bf16.msra.mxu0 0
    %923 = vmatprep.subr.bf16.mxu0 0
    %924 = vmatpush1.bf16.msra.mxu0 0
    %925 = vmatprep.subr.bf16.mxu0 0
    %926 = vmatpush1.bf16.msra.mxu0 0
    %927 = vmatprep.subr.bf16.mxu0 0
    %928 = vmatpush1.bf16.msra.mxu0 0
    %929 = vmatprep.subr.bf16.mxu0 0
    %930 = vmatpush1.bf16.msra.mxu0 0
    %931 = vmatprep.subr.bf16.mxu0 0
    %932 = vmatpush1.bf16.msra.mxu0 0
    %933 = vmatprep.subr.bf16.mxu0 0
    %934 = vmatpush1.bf16.msra.mxu0 0
    %935 = vmatprep.mubr.bf16.mxu0 0
    %936 = vmatmul.mubr.bf16.gmra.mrb[0].mxu0 %v898
    %v937 = vpop.f32.mrb[0].mxu0
    %v938 = vadd.f32 0.0, %v937
    %v939 = vpop.f32.mrb[0].mxu0
    %v940 = vpop.f32.mrb[0].mxu0
    %v941 = vpop.f32.mrb[0].mxu0
    %942 = vdwg.mxu0
    %943 = vrot.lane.b32.xlu0 %v334, 112
    %v944 = vpop.permute.xlu0 %943
    %v946 = vsel %vm335, %v894, 0
    %v949 = vsel %vm455, %v944, 0
    %951 = vmatprep.subr.bf16.mxu0 0
    %952 = vmatpush1.bf16.msra.mxu0 %v949
    %953 = vmatprep.subr.bf16.mxu0 0
    %954 = vmatpush1.bf16.msra.mxu0 0
    %955 = vmatprep.subr.bf16.mxu0 0
    %956 = vmatpush1.bf16.msra.mxu0 0
    %957 = vmatprep.subr.bf16.mxu0 0
    %958 = vmatpush1.bf16.msra.mxu0 0
    %959 = vmatprep.subr.bf16.mxu0 0
    %960 = vmatpush1.bf16.msra.mxu0 0
    %961 = vmatprep.subr.bf16.mxu0 0
    %962 = vmatpush1.bf16.msra.mxu0 0
    %963 = vmatprep.subr.bf16.mxu0 0
    %964 = vmatpush1.bf16.msra.mxu0 0
    %965 = vmatprep.subr.bf16.mxu0 0
    %966 = vmatpush1.bf16.msra.mxu0 0
    %967 = vmatprep.subr.bf16.mxu0 0
    %968 = vmatpush1.bf16.msra.mxu0 0
    %969 = vmatprep.subr.bf16.mxu0 0
    %970 = vmatpush1.bf16.msra.mxu0 0
    %971 = vmatprep.subr.bf16.mxu0 0
    %972 = vmatpush1.bf16.msra.mxu0 0
    %973 = vmatprep.subr.bf16.mxu0 0
    %974 = vmatpush1.bf16.msra.mxu0 0
    %975 = vmatprep.subr.bf16.mxu0 0
    %976 = vmatpush1.bf16.msra.mxu0 0
    %977 = vmatprep.subr.bf16.mxu0 0
    %978 = vmatpush1.bf16.msra.mxu0 0
    %979 = vmatprep.subr.bf16.mxu0 0
    %980 = vmatpush1.bf16.msra.mxu0 0
    %981 = vmatprep.subr.bf16.mxu0 0
    %982 = vmatpush1.bf16.msra.mxu0 0
    %983 = vmatprep.mubr.bf16.mxu0 0
    %984 = vmatmul.mubr.bf16.gmra.mrb[0].mxu0 %v946
    %v985 = vpop.f32.mrb[0].mxu0
    %v986 = vadd.f32 0.0, %v985
    %v987 = vpop.f32.mrb[0].mxu0
    %v988 = vpop.f32.mrb[0].mxu0
    %v989 = vpop.f32.mrb[0].mxu0
    %990 = vdwg.mxu0
    %991 = vrot.lane.b32.xlu0 %v329, 104
    %v992 = vpop.permute.xlu0 %991
    %993 = vrot.lane.b32.xlu0 %v331, 104
    %v994 = vpop.permute.xlu0 %993
    %v996 = vsel %vm335, %v992, 0
    %v999 = vsel %vm335, %v994, 0
    %1001 = vmatprep.subr.bf16.mxu0 0
    %1002 = vmatpush1.bf16.xpose.msra.mxu0 %v999
    %1003 = vmatprep.subr.bf16.mxu0 0
    %1004 = vmatpush1.bf16.xpose.msra.mxu0 0
    %1005 = vmatprep.subr.bf16.mxu0 0
    %1006 = vmatpush1.bf16.xpose.msra.mxu0 0
    %1007 = vmatprep.subr.bf16.mxu0 0
    %1008 = vmatpush1.bf16.xpose.msra.mxu0 0
    %1009 = vmatprep.subr.bf16.mxu0 0
    %1010 = vmatpush1.bf16.xpose.msra.mxu0 0
    %1011 = vmatprep.subr.bf16.mxu0 0
    %1012 = vmatpush1.bf16.xpose.msra.mxu0 0
    %1013 = vmatprep.subr.bf16.mxu0 0
    %1014 = vmatpush1.bf16.xpose.msra.mxu0 0
    %1015 = vmatprep.subr.bf16.mxu0 0
    %1016 = vmatpush1.bf16.xpose.msra.mxu0 0
    %1017 = vmatprep.subr.bf16.mxu0 0
    %1018 = vmatpush1.bf16.xpose.msra.mxu0 0
    %1019 = vmatprep.subr.bf16.mxu0 0
    %1020 = vmatpush1.bf16.xpose.msra.mxu0 0
    %1021 = vmatprep.subr.bf16.mxu0 0
    %1022 = vmatpush1.bf16.xpose.msra.mxu0 0
    %1023 = vmatprep.subr.bf16.mxu0 0
    %1024 = vmatpush1.bf16.xpose.msra.mxu0 0
    %1025 = vmatprep.subr.bf16.mxu0 0
    %1026 = vmatpush1.bf16.xpose.msra.mxu0 0
    %1027 = vmatprep.subr.bf16.mxu0 0
    %1028 = vmatpush1.bf16.xpose.msra.mxu0 0
    %1029 = vmatprep.subr.bf16.mxu0 0
    %1030 = vmatpush1.bf16.xpose.msra.mxu0 0
    %1031 = vmatprep.subr.bf16.mxu0 0
    %1032 = vmatpush1.bf16.xpose.msra.mxu0 0
    %1033 = vmatprep.mubr.bf16.mxu0 0
    %1034 = vmatmul.mubr.bf16.gmra.mrb[0].mxu0 %v996
    %v1035 = vpop.f32.mrb[0].mxu0
    %v1036 = vadd.f32 0.0, %v1035
    %v1037 = vpop.f32.mrb[0].mxu0
    %v1038 = vpop.f32.mrb[0].mxu0
    %v1039 = vpop.f32.mrb[0].mxu0
    %1040 = vdwg.mxu0
    %1041 = vrot.lane.b32.xlu0 %v330, 104
    %v1042 = vpop.permute.xlu0 %1041
    %1043 = vrot.lane.b32.xlu0 %v332, 104
    %v1044 = vpop.permute.xlu0 %1043
    %v1046 = vsel %vm335, %v1042, 0
    %v1049 = vsel %vm335, %v1044, 0
    %1051 = vmatprep.subr.bf16.mxu0 0
    %1052 = vmatpush1.bf16.xpose.msra.mxu0 %v1049
    %1053 = vmatprep.subr.bf16.mxu0 0
    %1054 = vmatpush1.bf16.xpose.msra.mxu0 0
    %1055 = vmatprep.subr.bf16.mxu0 0
    %1056 = vmatpush1.bf16.xpose.msra.mxu0 0
    %1057 = vmatprep.subr.bf16.mxu0 0
    %1058 = vmatpush1.bf16.xpose.msra.mxu0 0
    %1059 = vmatprep.subr.bf16.mxu0 0
    %1060 = vmatpush1.bf16.xpose.msra.mxu0 0
    %1061 = vmatprep.subr.bf16.mxu0 0
    %1062 = vmatpush1.bf16.xpose.msra.mxu0 0
    %1063 = vmatprep.subr.bf16.mxu0 0
    %1064 = vmatpush1.bf16.xpose.msra.mxu0 0
    %1065 = vmatprep.subr.bf16.mxu0 0
    %1066 = vmatpush1.bf16.xpose.msra.mxu0 0
    %1067 = vmatprep.subr.bf16.mxu0 0
    %1068 = vmatpush1.bf16.xpose.msra.mxu0 0
    %1069 = vmatprep.subr.bf16.mxu0 0
    %1070 = vmatpush1.bf16.xpose.msra.mxu0 0
    %1071 = vmatprep.subr.bf16.mxu0 0
    %1072 = vmatpush1.bf16.xpose.msra.mxu0 0
    %1073 = vmatprep.subr.bf16.mxu0 0
    %1074 = vmatpush1.bf16.xpose.msra.mxu0 0
    %1075 = vmatprep.subr.bf16.mxu0 0
    %1076 = vmatpush1.bf16.xpose.msra.mxu0 0
    %1077 = vmatprep.subr.bf16.mxu0 0
    %1078 = vmatpush1.bf16.xpose.msra.mxu0 0
    %1079 = vmatprep.subr.bf16.mxu0 0
    %1080 = vmatpush1.bf16.xpose.msra.mxu0 0
    %1081 = vmatprep.subr.bf16.mxu0 0
    %1082 = vmatpush1.bf16.xpose.msra.mxu0 0
    %1083 = vmatprep.mubr.bf16.mxu0 0
    %1084 = vmatmul.mubr.bf16.gmra.mrb[0].mxu0 %v1046
    %v1085 = vpop.f32.mrb[0].mxu0
    %v1086 = vadd.f32 0.0, %v1085
    %v1087 = vpop.f32.mrb[0].mxu0
    %v1088 = vpop.f32.mrb[0].mxu0
    %v1089 = vpop.f32.mrb[0].mxu0
    %1090 = vdwg.mxu0
    %v1091 = vsel %vm335, %v1036, -inf
    %1092 = vmax.xlane.f32.xlu0 %v1091
    %v1093 = vpop.xlane.xlu0 %1092
    %v1094 = vsel %vm335, %v1086, -inf
    %1095 = vmax.xlane.f32.xlu0 %v1094
    %v1096 = vpop.xlane.xlu0 %1095
    %v1097 = vsub.f32 %v1036, %v1093
    %v1098 = vsub.f32 %v1086, %v1096
    %v1099 = vmul.f32 %v1097, 1.442695
    %v1100 = vpow.pop %v1099
    %v1101 = vmul.f32 %v1098, 1.442695
    %v1102 = vpow.pop %v1101
    %v1103 = vsel %vm335, %v1100, 0.0
    %1104 = vadd.xlane.f32.xlu0 %v1103
    %v1105 = vpop.xlane.xlu0 %1104
    %v1106 = vsel %vm335, %v1102, 0.0
    %1107 = vadd.xlane.f32.xlu0 %v1106
    %v1108 = vpop.xlane.xlu0 %1107
    %v1109 = vrcp.pop %v1105
    %v1110 = vrcp.pop %v1108
    %v1111 = vmul.f32 %v1100, %v1109
    %v1112 = vmul.f32 %v1102, %v1110
    %v1113 = vpack.c.bf16 %v1111, %v1111
    %v1114 = vpack.c.bf16 %v1112, %v1112
    %1115 = vrot.lane.b32.xlu0 %v333, 104
    %v1116 = vpop.permute.xlu0 %1115
    %v1118 = vsel %vm335, %v1113, 0
    %v1121 = vsel %vm455, %v1116, 0
    %1123 = vmatprep.subr.bf16.mxu0 0
    %1124 = vmatpush1.bf16.msra.mxu0 %v1121
    %1125 = vmatprep.subr.bf16.mxu0 0
    %1126 = vmatpush1.bf16.msra.mxu0 0
    %1127 = vmatprep.subr.bf16.mxu0 0
    %1128 = vmatpush1.bf16.msra.mxu0 0
    %1129 = vmatprep.subr.bf16.mxu0 0
    %1130 = vmatpush1.bf16.msra.mxu0 0
    %1131 = vmatprep.subr.bf16.mxu0 0
    %1132 = vmatpush1.bf16.msra.mxu0 0
    %1133 = vmatprep.subr.bf16.mxu0 0
    %1134 = vmatpush1.bf16.msra.mxu0 0
    %1135 = vmatprep.subr.bf16.mxu0 0
    %1136 = vmatpush1.bf16.msra.mxu0 0
    %1137 = vmatprep.subr.bf16.mxu0 0
    %1138 = vmatpush1.bf16.msra.mxu0 0
    %1139 = vmatprep.subr.bf16.mxu0 0
    %1140 = vmatpush1.bf16.msra.mxu0 0
    %1141 = vmatprep.subr.bf16.mxu0 0
    %1142 = vmatpush1.bf16.msra.mxu0 0
    %1143 = vmatprep.subr.bf16.mxu0 0
    %1144 = vmatpush1.bf16.msra.mxu0 0
    %1145 = vmatprep.subr.bf16.mxu0 0
    %1146 = vmatpush1.bf16.msra.mxu0 0
    %1147 = vmatprep.subr.bf16.mxu0 0
    %1148 = vmatpush1.bf16.msra.mxu0 0
    %1149 = vmatprep.subr.bf16.mxu0 0
    %1150 = vmatpush1.bf16.msra.mxu0 0
    %1151 = vmatprep.subr.bf16.mxu0 0
    %1152 = vmatpush1.bf16.msra.mxu0 0
    %1153 = vmatprep.subr.bf16.mxu0 0
    %1154 = vmatpush1.bf16.msra.mxu0 0
    %1155 = vmatprep.mubr.bf16.mxu0 0
    %1156 = vmatmul.mubr.bf16.gmra.mrb[0].mxu0 %v1118
    %v1157 = vpop.f32.mrb[0].mxu0
    %v1158 = vadd.f32 0.0, %v1157
    %v1159 = vpop.f32.mrb[0].mxu0
    %v1160 = vpop.f32.mrb[0].mxu0
    %v1161 = vpop.f32.mrb[0].mxu0
    %1162 = vdwg.mxu0
    %1163 = vrot.lane.b32.xlu0 %v334, 104
    %v1164 = vpop.permute.xlu0 %1163
    %v1166 = vsel %vm335, %v1114, 0
    %v1169 = vsel %vm455, %v1164, 0
    %1171 = vmatprep.subr.bf16.mxu0 0
    %1172 = vmatpush1.bf16.msra.mxu0 %v1169
    %1173 = vmatprep.subr.bf16.mxu0 0
    %1174 = vmatpush1.bf16.msra.mxu0 0
    %1175 = vmatprep.subr.bf16.mxu0 0
    %1176 = vmatpush1.bf16.msra.mxu0 0
    %1177 = vmatprep.subr.bf16.mxu0 0
    %1178 = vmatpush1.bf16.msra.mxu0 0
    %1179 = vmatprep.subr.bf16.mxu0 0
    %1180 = vmatpush1.bf16.msra.mxu0 0
    %1181 = vmatprep.subr.bf16.mxu0 0
    %1182 = vmatpush1.bf16.msra.mxu0 0
    %1183 = vmatprep.subr.bf16.mxu0 0
    %1184 = vmatpush1.bf16.msra.mxu0 0
    %1185 = vmatprep.subr.bf16.mxu0 0
    %1186 = vmatpush1.bf16.msra.mxu0 0
    %1187 = vmatprep.subr.bf16.mxu0 0
    %1188 = vmatpush1.bf16.msra.mxu0 0
    %1189 = vmatprep.subr.bf16.mxu0 0
    %1190 = vmatpush1.bf16.msra.mxu0 0
    %1191 = vmatprep.subr.bf16.mxu0 0
    %1192 = vmatpush1.bf16.msra.mxu0 0
    %1193 = vmatprep.subr.bf16.mxu0 0
    %1194 = vmatpush1.bf16.msra.mxu0 0
    %1195 = vmatprep.subr.bf16.mxu0 0
    %1196 = vmatpush1.bf16.msra.mxu0 0
    %1197 = vmatprep.subr.bf16.mxu0 0
    %1198 = vmatpush1.bf16.msra.mxu0 0
    %1199 = vmatprep.subr.bf16.mxu0 0
    %1200 = vmatpush1.bf16.msra.mxu0 0
    %1201 = vmatprep.subr.bf16.mxu0 0
    %1202 = vmatpush1.bf16.msra.mxu0 0
    %1203 = vmatprep.mubr.bf16.mxu0 0
    %1204 = vmatmul.mubr.bf16.gmra.mrb[0].mxu0 %v1166
    %v1205 = vpop.f32.mrb[0].mxu0
    %v1206 = vadd.f32 0.0, %v1205
    %v1207 = vpop.f32.mrb[0].mxu0
    %v1208 = vpop.f32.mrb[0].mxu0
    %v1209 = vpop.f32.mrb[0].mxu0
    %1210 = vdwg.mxu0
    %1213 = vrot.lane.b32.xlu0 %v717, 8
    %v1214 = vpop.permute.xlu0 %1213
    %1215 = vrot.lane.b32.xlu0 %v766, 8
    %v1216 = vpop.permute.xlu0 %1215
    %1221 = vrot.lane.b32.xlu0 %v938, 16
    %v1222 = vpop.permute.xlu0 %1221
    %1223 = vrot.lane.b32.xlu0 %v986, 16
    %v1224 = vpop.permute.xlu0 %1223
    %1229 = vrot.lane.b32.xlu0 %v1158, 24
    %v1230 = vpop.permute.xlu0 %1229
    %1231 = vrot.lane.b32.xlu0 %v1206, 24
    %v1232 = vpop.permute.xlu0 %1231
    %v1235 = vsel %vm335, %v494, %v1214
    %v1236 = vsel %vm335, %v540, %v1216
    %vm1237 = vcmask 130048
    %v1238 = vsel %vm1237, %v1235, %v1222
    %v1239 = vsel %vm1237, %v1236, %v1224
    %vm1240 = vcmask 195584
    %v1241 = vsel %vm1240, %v1238, %v1230
    %v1242 = vsel %vm1240, %v1239, %v1232
    %v1243 = vpack.c.bf16 %v1242, %v1241
    %v1244 = vld [vmem:[#allocation7] sm:$0xf]
    %v1245 = vld [vmem:[#allocation7 + $0x4] sm:$0xf]
    %v1246 = vld [vmem:[#allocation7 + $0x8] sm:$0xf]
    %v1247 = vld [vmem:[#allocation7 + $0xc] sm:$0xf]
    %v1248 = vld [vmem:[#allocation8] sm:$0x1]
    %v1250 = vlaneseq
    %v1251 = vshrl.u32 %v1250, 7
    %v1252 = vsub.s32 0, %v1251
    %v1253 = vrot.slane %v1248, %v1252
    %v1259 = vunpack.c.l.b16 %v1244
    %v1260 = vunpack.c.l.b16 %v1245
    %v1261 = vunpack.c.l.b16 %v1246
    %v1262 = vunpack.c.l.b16 %v1247
    %v1263 = vpack.c.b16 %v1260, %v1259
    %v1264 = vpack.c.b16 %v1262, %v1261
    %v1268 = vsel %vm150, %v1243, 0
    %1270 = vmatprep.subr.bf16.mxu0 0
    %1271 = vmatpush1.bf16.msra.mxu0 %v1263
    %1272 = vmatprep.subr.bf16.mxu0 0
    %1273 = vmatpush1.bf16.msra.mxu0 %v1264
    %1274 = vmatprep.subr.bf16.mxu0 0
    %1275 = vmatpush1.bf16.msra.mxu0 0
    %1276 = vmatprep.subr.bf16.mxu0 0
    %1277 = vmatpush1.bf16.msra.mxu0 0
    %1278 = vmatprep.subr.bf16.mxu0 0
    %1279 = vmatpush1.bf16.msra.mxu0 0
    %1280 = vmatprep.subr.bf16.mxu0 0
    %1281 = vmatpush1.bf16.msra.mxu0 0
    %1282 = vmatprep.subr.bf16.mxu0 0
    %1283 = vmatpush1.bf16.msra.mxu0 0
    %1284 = vmatprep.subr.bf16.mxu0 0
    %1285 = vmatpush1.bf16.msra.mxu0 0
    %1286 = vmatprep.subr.bf16.mxu0 0
    %1287 = vmatpush1.bf16.msra.mxu0 0
    %1288 = vmatprep.subr.bf16.mxu0 0
    %1289 = vmatpush1.bf16.msra.mxu0 0
    %1290 = vmatprep.subr.bf16.mxu0 0
    %1291 = vmatpush1.bf16.msra.mxu0 0
    %1292 = vmatprep.subr.bf16.mxu0 0
    %1293 = vmatpush1.bf16.msra.mxu0 0
    %1294 = vmatprep.subr.bf16.mxu0 0
    %1295 = vmatpush1.bf16.msra.mxu0 0
    %1296 = vmatprep.subr.bf16.mxu0 0
    %1297 = vmatpush1.bf16.msra.mxu0 0
    %1298 = vmatprep.subr.bf16.mxu0 0
    %1299 = vmatpush1.bf16.msra.mxu0 0
    %1300 = vmatprep.subr.bf16.mxu0 0
    %1301 = vmatpush1.bf16.msra.mxu0 0
    %1302 = vmatprep.mubr.bf16.mxu0 0
    %1303 = vmatmul.mubr.bf16.gmra.mrb[0].mxu0 %v1268
    %v1304 = vpop.f32.mrb[0].mxu0
    %v1305 = vadd.f32 %v1253, %v1304
    %v1306 = vpop.f32.mrb[0].mxu0
    %v1307 = vpop.f32.mrb[0].mxu0
    %v1308 = vadd.f32 %v1253, %v1307
    %v1309 = vpop.f32.mrb[0].mxu0
    %1310 = vdwg.mxu0
    %v1311 = vadd.f32 %v1305, %v124
    %v1312 = vadd.f32 %v1308, %v125
    %v1313 = vld [vmem:[#allocation10] sm:$0x1]
    %v1314 = vld [vmem:[%s10] sm:$0x1]
    %v1315 = vsel %vm150, %v1311, 0.0
    %1316 = vadd.xlane.f32.xlu0 %v1315
    %v1317 = vpop.xlane.xlu0 %1316
    %v1318 = vsel %vm150, %v1312, 0.0
    %1319 = vadd.xlane.f32.xlu0 %v1318
    %v1320 = vpop.xlane.xlu0 %1319
    %v1321 = vrcp.pop 32.0
    %v1322 = vmul.f32 %v1317, %v1321
    %v1323 = vmul.f32 %v1320, %v1321
    %v1324 = vsub.f32 %v1311, %v1322
    %v1325 = vsub.f32 %v1312, %v1323
    %v1326 = vmul.f32 %v1324, %v1324
    %v1327 = vmul.f32 %v1325, %v1325
    %v1328 = vsel %vm150, %v1326, 0.0
    %1329 = vadd.xlane.f32.xlu0 %v1328
    %v1330 = vpop.xlane.xlu0 %1329
    %v1331 = vsel %vm150, %v1327, 0.0
    %1332 = vadd.xlane.f32.xlu0 %v1331
    %v1333 = vpop.xlane.xlu0 %1332
    %v1334 = vmul.f32 %v1330, %v1321
    %v1335 = vmul.f32 %v1333, %v1321
    %v1336 = vadd.f32 %v1334, 1e-12
    %v1337 = vadd.f32 %v1335, 1e-12
    %v1338 = vrsqrt.pop %v1336
    %v1339 = vrsqrt.pop %v1337
    %v1340 = vmul.f32 %v1324, %v1338
    %v1341 = vmul.f32 %v1325, %v1339
    %v1343 = vlaneseq
    %v1344 = vshrl.u32 %v1343, 7
    %v1345 = vsub.s32 0, %v1344
    %v1346 = vrot.slane %v1313, %v1345
    %v1348 = vmul.f32 %v1340, %v1346
    %v1349 = vmul.f32 %v1341, %v1346
    %v1351 = vlaneseq
    %v1352 = vshrl.u32 %v1351, 7
    %v1353 = vsub.s32 0, %v1352
    %v1354 = vrot.slane %v1314, %v1353
    %v1356 = vadd.f32 %v1348, %v1354
    %v1357 = vadd.f32 %v1349, %v1354
    %v1358 = vpack.c.bf16 %v1357, %v1356
    %v1359 = vld [vmem:[%s11] sm:$0xf]
    %v1360 = vld [vmem:[%s11 + $0x4] sm:$0xf]
    %v1361 = vld [vmem:[%s11 + $0x8] sm:$0xf]
    %v1362 = vld [vmem:[%s11 + $0xc] sm:$0xf]
    %v1363 = vld [vmem:[%s12] sm:$0x1]
    %v1365 = vlaneseq
    %v1366 = vshrl.u32 %v1365, 7
    %v1367 = vsub.s32 0, %v1366
    %v1368 = vrot.slane %v1363, %v1367
    %v1374 = vunpack.c.l.b16 %v1359
    %v1375 = vunpack.c.l.b16 %v1360
    %v1376 = vunpack.c.l.b16 %v1361
    %v1377 = vunpack.c.l.b16 %v1362
    %v1378 = vpack.c.b16 %v1375, %v1374
    %v1379 = vpack.c.b16 %v1377, %v1376
    %v1383 = vsel %vm150, %v1358, 0
    %1385 = vmatprep.subr.bf16.mxu0 0
    %1386 = vmatpush1.bf16.msra.mxu0 %v1378
    %1387 = vmatprep.subr.bf16.mxu0 0
    %1388 = vmatpush1.bf16.msra.mxu0 %v1379
    %1389 = vmatprep.subr.bf16.mxu0 0
    %1390 = vmatpush1.bf16.msra.mxu0 0
    %1391 = vmatprep.subr.bf16.mxu0 0
    %1392 = vmatpush1.bf16.msra.mxu0 0
    %1393 = vmatprep.subr.bf16.mxu0 0
    %1394 = vmatpush1.bf16.msra.mxu0 0
    %1395 = vmatprep.subr.bf16.mxu0 0
    %1396 = vmatpush1.bf16.msra.mxu0 0
    %1397 = vmatprep.subr.bf16.mxu0 0
    %1398 = vmatpush1.bf16.msra.mxu0 0
    %1399 = vmatprep.subr.bf16.mxu0 0
    %1400 = vmatpush1.bf16.msra.mxu0 0
    %1401 = vmatprep.subr.bf16.mxu0 0
    %1402 = vmatpush1.bf16.msra.mxu0 0
    %1403 = vmatprep.subr.bf16.mxu0 0
    %1404 = vmatpush1.bf16.msra.mxu0 0
    %1405 = vmatprep.subr.bf16.mxu0 0
    %1406 = vmatpush1.bf16.msra.mxu0 0
    %1407 = vmatprep.subr.bf16.mxu0 0
    %1408 = vmatpush1.bf16.msra.mxu0 0
    %1409 = vmatprep.subr.bf16.mxu0 0
    %1410 = vmatpush1.bf16.msra.mxu0 0
    %1411 = vmatprep.subr.bf16.mxu0 0
    %1412 = vmatpush1.bf16.msra.mxu0 0
    %1413 = vmatprep.subr.bf16.mxu0 0
    %1414 = vmatpush1.bf16.msra.mxu0 0
    %1415 = vmatprep.subr.bf16.mxu0 0
    %1416 = vmatpush1.bf16.msra.mxu0 0
    %1417 = vmatprep.mubr.bf16.mxu0 0
    %1418 = vmatmul.mubr.bf16.gmra.mrb[0].mxu0 %v1383
    %v1419 = vpop.f32.mrb[0].mxu0
    %v1420 = vadd.f32 %v1368, %v1419
    %v1421 = vpop.f32.mrb[0].mxu0
    %v1422 = vpop.f32.mrb[0].mxu0
    %v1423 = vadd.f32 %v1368, %v1422
    %v1424 = vpop.f32.mrb[0].mxu0
    %1425 = vdwg.mxu0
    %v1426 = vmul.f32 %v1420, %v1420
    %v1427 = vmul.f32 %v1423, %v1423
    %v1428 = vmul.f32 %v1420, %v1426
    %v1429 = vmul.f32 %v1423, %v1427
    %v1430 = vmul.f32 %v1428, 0.044715
    %v1431 = vmul.f32 %v1429, 0.044715
    %v1432 = vadd.f32 %v1420, %v1430
    %v1433 = vadd.f32 %v1423, %v1431
    %v1434 = vmul.f32 %v1432, 0.7978846
    %v1435 = vmul.f32 %v1433, 0.7978846
    %v1436 = vtanh.pop %v1434
    %v1437 = vtanh.pop %v1435
    %v1438 = vadd.f32 %v1436, 1.0
    %v1439 = vadd.f32 %v1437, 1.0
    %v1440 = vmul.f32 %v1438, 0.5
    %v1441 = vmul.f32 %v1439, 0.5
    %v1442 = vmul.f32 %v1420, %v1440
    %v1443 = vmul.f32 %v1423, %v1441
    %v1444 = vpack.c.bf16 %v1443, %v1442
    %v1445 = vld [vmem:[%s13] sm:$0xf]
    %v1446 = vld [vmem:[%s13 + $0x4] sm:$0xf]
    %v1447 = vld [vmem:[%s13 + $0x8] sm:$0xf]
    %v1448 = vld [vmem:[%s13 + $0xc] sm:$0xf]
    %v1449 = vld [vmem:[%s13 + $0x10] sm:$0xf]
    %v1450 = vld [vmem:[%s13 + $0x14] sm:$0xf]
    %v1451 = vld [vmem:[%s13 + $0x18] sm:$0xf]
    %v1452 = vld [vmem:[%s13 + $0x1c] sm:$0xf]
    %v1453 = vld [vmem:[%s14] sm:$0x1]
    %v1455 = vlaneseq
    %v1456 = vshrl.u32 %v1455, 7
    %v1457 = vsub.s32 0, %v1456
    %v1458 = vrot.slane %v1453, %v1457
    %v1468 = vunpack.c.l.b16 %v1445
    %v1469 = vunpack.c.l.b16 %v1446
    %v1470 = vunpack.c.l.b16 %v1447
    %v1471 = vunpack.c.l.b16 %v1448
    %v1472 = vunpack.c.l.b16 %v1449
    %v1473 = vunpack.c.l.b16 %v1450
    %v1474 = vunpack.c.l.b16 %v1451
    %v1475 = vunpack.c.l.b16 %v1452
    %v1476 = vpack.c.b16 %v1469, %v1468
    %v1477 = vpack.c.b16 %v1471, %v1470
    %v1478 = vpack.c.b16 %v1473, %v1472
    %v1479 = vpack.c.b16 %v1475, %v1474
    %vm1484 = vcmask 523264
    %v1486 = vsel %vm1484, %v1444, 0
    %1488 = vmatprep.subr.bf16.mxu0 0
    %1489 = vmatpush1.bf16.msra.mxu0 %v1476
    %1490 = vmatprep.subr.bf16.mxu0 0
    %1491 = vmatpush1.bf16.msra.mxu0 %v1477
    %1492 = vmatprep.subr.bf16.mxu0 0
    %1493 = vmatpush1.bf16.msra.mxu0 %v1478
    %1494 = vmatprep.subr.bf16.mxu0 0
    %1495 = vmatpush1.bf16.msra.mxu0 %v1479
    %1496 = vmatprep.subr.bf16.mxu0 0
    %1497 = vmatpush1.bf16.msra.mxu0 0
    %1498 = vmatprep.subr.bf16.mxu0 0
    %1499 = vmatpush1.bf16.msra.mxu0 0
    %1500 = vmatprep.subr.bf16.mxu0 0
    %1501 = vmatpush1.bf16.msra.mxu0 0
    %1502 = vmatprep.subr.bf16.mxu0 0
    %1503 = vmatpush1.bf16.msra.mxu0 0
    %1504 = vmatprep.subr.bf16.mxu0 0
    %1505 = vmatpush1.bf16.msra.mxu0 0
    %1506 = vmatprep.subr.bf16.mxu0 0
    %1507 = vmatpush1.bf16.msra.mxu0 0
    %1508 = vmatprep.subr.bf16.mxu0 0
    %1509 = vmatpush1.bf16.msra.mxu0 0
    %1510 = vmatprep.subr.bf16.mxu0 0
    %1511 = vmatpush1.bf16.msra.mxu0 0
    %1512 = vmatprep.subr.bf16.mxu0 0
    %1513 = vmatpush1.bf16.msra.mxu0 0
    %1514 = vmatprep.subr.bf16.mxu0 0
    %1515 = vmatpush1.bf16.msra.mxu0 0
    %1516 = vmatprep.subr.bf16.mxu0 0
    %1517 = vmatpush1.bf16.msra.mxu0 0
    %1518 = vmatprep.subr.bf16.mxu0 0
    %1519 = vmatpush1.bf16.msra.mxu0 0
    %1520 = vmatprep.mubr.bf16.mxu0 0
    %1521 = vmatmul.mubr.bf16.gmra.mrb[0].mxu0 %v1486
    %v1522 = vpop.f32.mrb[0].mxu0
    %v1523 = vadd.f32 %v1458, %v1522
    %v1524 = vpop.f32.mrb[0].mxu0
    %v1525 = vpop.f32.mrb[0].mxu0
    %v1526 = vadd.f32 %v1458, %v1525
    %v1527 = vpop.f32.mrb[0].mxu0
    %1528 = vdwg.mxu0
    %v1529 = vadd.f32 %v1523, %v1356
    %v1530 = vadd.f32 %v1526, %v1357
    %v1531 = vld [vmem:[%s15] sm:$0x1]
    %v1532 = vld [vmem:[%s16] sm:$0x1]
    %v1533 = vsel %vm150, %v1529, 0.0
    %1534 = vadd.xlane.f32.xlu0 %v1533
    %v1535 = vpop.xlane.xlu0 %1534
    %v1536 = vsel %vm150, %v1530, 0.0
    %1537 = vadd.xlane.f32.xlu0 %v1536
    %v1538 = vpop.xlane.xlu0 %1537
    %v1539 = vmul.f32 %v1535, %v1321
    %v1540 = vmul.f32 %v1538, %v1321
    %v1541 = vsub.f32 %v1529, %v1539
    %v1542 = vsub.f32 %v1530, %v1540
    %v1543 = vmul.f32 %v1541, %v1541
    %v1544 = vmul.f32 %v1542, %v1542
    %v1545 = vsel %vm150, %v1543, 0.0
    %1546 = vadd.xlane.f32.xlu0 %v1545
    %v1547 = vpop.xlane.xlu0 %1546
    %v1548 = vsel %vm150, %v1544, 0.0
    %1549 = vadd.xlane.f32.xlu0 %v1548
    %v1550 = vpop.xlane.xlu0 %1549
    %v1551 = vmul.f32 %v1547, %v1321
    %v1552 = vmul.f32 %v1550, %v1321
    %v1553 = vadd.f32 %v1551, 1e-12
    %v1554 = vadd.f32 %v1552, 1e-12
    %v1555 = vrsqrt.pop %v1553
    %v1556 = vrsqrt.pop %v1554
    %v1557 = vmul.f32 %v1541, %v1555
    %v1558 = vmul.f32 %v1542, %v1556
    %v1560 = vlaneseq
    %v1561 = vshrl.u32 %v1560, 7
    %v1562 = vsub.s32 0, %v1561
    %v1563 = vrot.slane %v1531, %v1562
    %v1565 = vmul.f32 %v1557, %v1563
    %v1566 = vmul.f32 %v1558, %v1563
    %v1568 = vlaneseq
    %v1569 = vshrl.u32 %v1568, 7
    %v1570 = vsub.s32 0, %v1569
    %v1571 = vrot.slane %v1532, %v1570
    %v1573 = vadd.f32 %v1565, %v1571
    %v1574 = vadd.f32 %v1566, %v1571
    %1575 = vst.msk [vmem:[#allocation11] sm:$0xff] %vm150, %v1573
    %1576 = vst.msk [vmem:[#allocation11 + $0x8] sm:$0xff] %vm150, %v1574
    // Predicated region
    $region90: #{tpu_custom_call.1} parent=1 // pred_check
      _
    $region91: #{tpu_custom_call.1} parent=1 // pred_check_branch
      %1578 = sbr.rel (0) target = $region93
    $region92: #{tpu_custom_call.1} parent=1 // pred_region
      %s1580 = ssub.s32 256, 256
      %1581 = vsyncadd [#allocation4], %s1580
      %s1582 = sshll.u32 [#allocation11], 4
      %s1583 = int_to_ptr.vmem [resolvable:$true] %s1582
      %1588 = dma.vmem_to_hbm [thread:$0]  %s1583, 256, %s17, [#allocation4], 128, 128, 8
    $region93: #{tpu_custom_call.1} parent=1 // pred_fallthru
      _
    // Predicated region
    $region94: #{tpu_custom_call.1} parent=1 // pred_check
      _
    $region95: #{tpu_custom_call.1} parent=1 // pred_check_branch
      %1590 = sbr.rel (0) target = $region97
    $region96: #{tpu_custom_call.1} parent=1 // pred_region
      %s1592 = ssub.s32 256, 256
      %1593 = vsyncadd [#allocation13], %s1592
      %s1594 = sshll.u32 [#allocation12], 4
      %s1595 = int_to_ptr.vmem [resolvable:$true] %s1594
      %1600 = dma.vmem_to_hbm [thread:$0]  %s1595, 256, %s18, [#allocation13], 128, 128, 8
    $region97: #{tpu_custom_call.1} parent=1 // pred_fallthru
      _
    // Predicated region
    $region98: #{tpu_custom_call.1} parent=1 // pred_check
      _
    $region99: #{tpu_custom_call.1} parent=1 // pred_check_branch
      %1602 = sbr.rel (0) target = $region101
    $region100: #{tpu_custom_call.1} parent=1 // pred_region
      %s1604 = ssub.s32 256, 256
      %1605 = vsyncadd [#allocation13], %s1604
      %s1606 = sshll.u32 [#allocation14], 4
      %s1607 = int_to_ptr.vmem [resolvable:$true] %s1606
      %1612 = dma.vmem_to_hbm [thread:$0]  %s1607, 256, %s19, [#allocation13], 128, 128, 8
    $region101: #{tpu_custom_call.1} parent=1 // pred_fallthru
      _
    // Predicated region
    $region102: #{tpu_custom_call.1} parent=1 // pred_check
      _
    $region103: #{tpu_custom_call.1} parent=1 // pred_check_branch
      %1614 = sbr.rel (0) target = $region105
    $region104: #{tpu_custom_call.1} parent=1 // pred_region
      %1615 = dma.done [#allocation4], 256
    $region105: #{tpu_custom_call.1} parent=1 // pred_fallthru
      _
    // Predicated region
    $region106: #{tpu_custom_call.1} parent=1 // pred_check
      _
    $region107: #{tpu_custom_call.1} parent=1 // pred_check_branch
      %1617 = sbr.rel (0) target = $region109
    $region108: #{tpu_custom_call.1} parent=1 // pred_region
      %1618 = dma.done [#allocation13], 256
    $region109: #{tpu_custom_call.1} parent=1 // pred_fallthru
      _
    // Predicated region
    $region110: #{tpu_custom_call.1} parent=1 // pred_check
      _
    $region111: #{tpu_custom_call.1} parent=1 // pred_check_branch
      %1620 = sbr.rel (0) target = $region113
    $region112: #{tpu_custom_call.1} parent=1 // pred_region
      %1621 = dma.done [#allocation13], 256
    $region113: #{tpu_custom_call.1} parent=1 // pred_fallthru
      _
    %1622 = vsyncpa [#allocation3], 1
    %1623 = vsyncpa [#allocation6], 1
    %1624 = vsyncpa [#allocation9], 1
    %1625 = vsyncpa [#allocation4], 1
    %1626 = vsyncpa [#allocation13], 1

</llo_original>
